<compile_context>
chip_gen: v5e
topology: v5e:2x2
jax: 0.10.0
libtpu: 0.0.40
codegen_flags: <defaults>
</compile_context>

<pallas_src>
import functools
import math

import jax
import jax.numpy as jnp
import numpy as np
from jax.experimental import pallas as pl
from jax.experimental.pallas import tpu as pltpu


# --------------------------------------------------------------------------------------
# Kernel A: RGAT attention + ReLU + Linear(2F->F), plus per-batch BatchNorm partial sums.
# Grid: (batch, destination-row tiles); row tiles never straddle the set boundary.
# --------------------------------------------------------------------------------------
def _attn_linear_kernel(x_ref, kmix_ref, w0_ref, w1_ref, wqt_ref, bconv_ref,
                        wlx_ref, wlm_ref, blin_ref,
                        msg2_ref, stats_ref, hmix_sc,
                        *, n0, tile_i, n_nodes, feat):
    del feat
    t = pl.program_id(1)

    # Once per batch item (row-tile 0): relation-mixed node transform for all N sources.
    #   H_mix[0, j] = W0 x_j (j in set 0) | W1 x_j (j in set 1)   -> used by dest set 0
    #   H_mix[1, j] = W1 x_j (j in set 0) | W0 x_j (j in set 1)   -> used by dest set 1
    @pl.when(t == 0)
    def _():
        h0 = jnp.dot(x_ref[...], w0_ref[...], preferred_element_type=jnp.float32)  # (N,F)
        h1 = jnp.dot(x_ref[...], w1_ref[...], preferred_element_type=jnp.float32)  # (N,F)
        hmix_sc[0, :n0, :] = h0[:n0, :]
        hmix_sc[0, n0:, :] = h1[n0:, :]
        hmix_sc[1, :n0, :] = h1[:n0, :]
        hmix_sc[1, n0:, :] = h0[n0:, :]

    @pl.when(t == 0)
    def _():
        stats_ref[...] = jnp.zeros_like(stats_ref)

    r0 = pl.multiple_of(t * tile_i, tile_i)
    x_rows = x_ref[pl.ds(r0, tile_i), :]                              # (tile_i, F)

    # Attention query terms for this tile: VPU multiply + lane reduce (no narrow MXU op).
    q0 = jnp.sum(x_rows * wqt_ref[0:1, :], axis=-1, keepdims=True)    # (tile_i, 1)
    q1 = jnp.sum(x_rows * wqt_ref[1:2, :], axis=-1, keepdims=True)    # (tile_i, 1)

    # Tiles never straddle the n0 boundary, so the destination set (and hence the
    # per-column relation pattern) is constant inside the tile.
    in_set1 = r0 >= n0                                                # traced scalar bool
    set_idx = in_set1.astype(jnp.int32)

    cols = jax.lax.broadcasted_iota(jnp.int32, (1, n_nodes), 1)
    same_cols = (cols >= n0) == in_set1                               # (1, N) same-set cols
    kmix_row = jnp.where(in_set1, kmix_ref[1:2, :], kmix_ref[0:1, :])  # (1, N) mixed keys

    logits = jnp.where(same_cols, q0, q1) + kmix_row                  # (tile_i, N) additive
    logits = jnp.where(logits > 0, logits, 0.2 * logits)              # LeakyReLU(0.2)
    rows = r0 + jax.lax.broadcasted_iota(jnp.int32, (tile_i, n_nodes), 0)
    full_cols = jax.lax.broadcasted_iota(jnp.int32, (tile_i, n_nodes), 1)
    logits = jnp.where(rows == full_cols, -1e30, logits)              # no self loops

    # Across-relation softmax over incoming edges of each destination row.
    m = jnp.max(logits, axis=-1, keepdims=True)
    e = jnp.exp(logits - m)                                           # exp(-1e30 - m) == 0
    attn = e * pl.reciprocal(jnp.sum(e, axis=-1, keepdims=True), approx=True)

    # Single aggregation matmul against the relation-mixed transform for this dest set.
    msg = jnp.dot(attn, hmix_sc[set_idx], preferred_element_type=jnp.float32)
    msg1 = jnp.maximum(msg + bconv_ref[...], 0.0)                     # conv bias + relu

    # Linear(2F -> F) on [x, msg1], split as two lane-aligned matmuls (no lane concat).
    msg2 = (jnp.dot(x_rows, wlx_ref[...], preferred_element_type=jnp.float32)
            + jnp.dot(msg1, wlm_ref[...], preferred_element_type=jnp.float32)
            + blin_ref[...])
    msg2_ref[...] = msg2

    # BatchNorm partial sums accumulated in the resident (2, F) output block.
    s = jnp.sum(msg2, axis=0, keepdims=True)                          # (1, F)
    ss = jnp.sum(msg2 * msg2, axis=0, keepdims=True)                  # (1, F)
    stats_ref[...] += jnp.concatenate([s, ss], axis=0)                # (2, F)


# --------------------------------------------------------------------------------------
# Kernel B: BatchNorm apply + residual  (out = x + msg2 * scale + shift), lane-dense.
# --------------------------------------------------------------------------------------
def _bn_residual_kernel(x_ref, m2_ref, scale_ref, shift_ref, out_ref):
    out_ref[...] = x_ref[...] + m2_ref[...] * scale_ref[...] + shift_ref[...]


def _vmem_budget(est_bytes):
    """Per-generation VMEM limit: ~75% of physical capacity, with a sane floor."""
    cap = 128 * 1024 * 1024
    try:
        cap = int(pltpu.get_tpu_info().vmem_capacity_bytes)
    except Exception:
        pass
    hi = max(int(cap * 3 // 4), 4 * 1024 * 1024)   # 48 MiB on v7x, ~96 MiB on v5e/v6e
    return int(min(max(2 * est_bytes, 4 * 1024 * 1024), hi))


def _pick_row_tile(n0, n1, max_tile=512):
    """Largest multiple-of-8 tile that divides both set sizes (tiles never straddle n0)."""
    g = math.gcd(n0, n1)
    for t in range(min(g, max_tile), 7, -1):
        if g % t == 0 and t % 8 == 0:
            return t
    raise ValueError("n0 and n1 must be multiples of 8 for the Pallas RGAT kernel "
                     f"(got n0={n0}, n1={n1}).")


def _prepare_kernel_params(p):
    """Fuse raw layer params into MXU/VPU-friendly kernel weights (wrapper precompute)."""
    F = p['w0'].shape[0]
    wq0 = (p['w0'] @ p['q'])[:, 0]                                  # (F,): x.wq0 = q0
    wq1 = (p['w1'] @ p['q'])[:, 0]
    wk0 = (p['w0'] @ p['k'])[:, 0]                                  # (F,): x.wk0 = k0
    wk1 = (p['w1'] @ p['k'])[:, 0]
    return dict(
        w0=p['w0'], w1=p['w1'],
        wqt=jnp.stack([wq0, wq1], axis=0),                          # (2, F) query rows
        wk0=wk0, wk1=wk1,
        bconv=p['bconv'].reshape(1, F),
        wlx=jnp.transpose(p['wlin'][:, :F]),                        # (F, F): x part
        wlm=jnp.transpose(p['wlin'][:, F:]),                        # (F, F): msg1 part
        blin=p['blin'].reshape(1, F),
        gamma=p['gamma'], beta=p['beta'])


def _bn_residual_apply(x, msg2, scale, shift, vmem_limit):
    """x + msg2 * scale + shift, with lane-dense blocks when N*F is a multiple of 128."""
    B, N, F = x.shape
    cost = pl.CostEstimate(flops=3 * B * N * F, transcendentals=0,
                           bytes_accessed=4 * (4 * B * N * F + 2 * N * F))
    if (N * F) % 128 == 0:
        L = 128
        R = (N * F) // L
        xf = x.reshape(B, R, L)
        mf = msg2.reshape(B, R, L)
        sc = jnp.broadcast_to(scale, (N, F)).reshape(R, L)
        sh = jnp.broadcast_to(shift, (N, F)).reshape(R, L)
        out = pl.pallas_call(
            _bn_residual_kernel,
            grid=(B,),
            in_specs=[pl.BlockSpec((None, R, L), lambda b: (b, 0, 0)),
                      pl.BlockSpec((None, R, L), lambda b: (b, 0, 0)),
                      pl.BlockSpec((R, L), lambda b: (0, 0)),
                      pl.BlockSpec((R, L), lambda b: (0, 0))],
            out_specs=pl.BlockSpec((None, R, L), lambda b: (b, 0, 0)),
            out_shape=jax.ShapeDtypeStruct((B, R, L), jnp.float32),
            input_output_aliases={0: 0},
            compiler_params=pltpu.CompilerParams(
                dimension_semantics=("parallel",),
                vmem_limit_bytes=vmem_limit),
            cost_estimate=cost,
        )(xf, mf, sc, sh)
        return out.reshape(B, N, F)
    # Fallback: per-batch (N, F) blocks with broadcast (1, F) scale/shift.
    return pl.pallas_call(
        _bn_residual_kernel,
        grid=(B,),
        in_specs=[pl.BlockSpec((None, N, F), lambda b: (b, 0, 0)),
                  pl.BlockSpec((None, N, F), lambda b: (b, 0, 0)),
                  pl.BlockSpec((1, F), lambda b: (0, 0)),
                  pl.BlockSpec((1, F), lambda b: (0, 0))],
        out_specs=pl.BlockSpec((None, N, F), lambda b: (b, 0, 0)),
        out_shape=jax.ShapeDtypeStruct((B, N, F), jnp.float32),
        input_output_aliases={0: 0},
        compiler_params=pltpu.CompilerParams(
            dimension_semantics=("parallel",),
            vmem_limit_bytes=vmem_limit),
        cost_estimate=cost,
    )(x, msg2, scale.reshape(1, F), shift.reshape(1, F))


def rgat_layer(x, kp, *, n0, tile_i):
    """One RGAT + Linear + BatchNorm + residual layer. x: (B, N, F) float32."""
    B, N, F = x.shape
    assert N % tile_i == 0 and n0 % tile_i == 0 and tile_i % 8 == 0, \
        "row tile must divide n0 and N and be a multiple of 8"
    T = N // tile_i

    # Pre-mixed attention key rows per destination set (tiny wrapper projections):
    #   kmix[b, s, j] = k_{rel(s, set(j))}(x_j), lane-dense (2, N) rows per batch item.
    k0 = jnp.einsum('bnf,f->bn', x, kp['wk0'])
    k1 = jnp.einsum('bnf,f->bn', x, kp['wk1'])
    kmix = jnp.stack([
        jnp.concatenate([k0[:, :n0], k1[:, n0:]], axis=1),
        jnp.concatenate([k1[:, :n0], k0[:, n0:]], axis=1)], axis=1)   # (B, 2, N)

    # VMEM budget (double-buffered blocks + mixed-transform scratch + logit temporaries).
    est = 4 * (2 * N * F + 4 * N
               + 2 * (4 * F * F + 2 * F + 2 * F + F)
               + 2 * tile_i * F + 4 * F
               + 2 * N * F
               + 8 * tile_i * N + 8 * tile_i * F)
    vmem_limit = _vmem_budget(est)

    cost = pl.CostEstimate(
        flops=B * (8 * N * F * F + 2 * N * N * F + 12 * N * N),
        transcendentals=B * N * N,
        bytes_accessed=4 * (2 * B * N * F + 2 * B * N + 2 * B * F + 4 * F * F + 6 * F))

    kern_a = functools.partial(_attn_linear_kernel,
                               n0=n0, tile_i=tile_i, n_nodes=N, feat=F)
    msg2, stats = pl.pallas_call(
        kern_a,
        grid=(B, T),
        in_specs=[
            pl.BlockSpec((None, N, F), lambda b, t: (b, 0, 0)),       # x (all nodes per b)
            pl.BlockSpec((None, 2, N), lambda b, t: (b, 0, 0)),       # mixed key rows
            pl.BlockSpec((F, F), lambda b, t: (0, 0)),                # W0
            pl.BlockSpec((F, F), lambda b, t: (0, 0)),                # W1
            pl.BlockSpec((2, F), lambda b, t: (0, 0)),                # [W0 a_q ; W1 a_q]
            pl.BlockSpec((1, F), lambda b, t: (0, 0)),                # conv bias
            pl.BlockSpec((F, F), lambda b, t: (0, 0)),                # Linear W (x part)
            pl.BlockSpec((F, F), lambda b, t: (0, 0)),                # Linear W (msg1 part)
            pl.BlockSpec((1, F), lambda b, t: (0, 0)),                # Linear bias
        ],
        out_specs=[
            pl.BlockSpec((None, tile_i, F), lambda b, t: (b, t, 0)),  # msg2
            pl.BlockSpec((None, 2, F), lambda b, t: (b, 0, 0)),       # BN partials (per b)
        ],
        out_shape=[
            jax.ShapeDtypeStruct((B, N, F), jnp.float32),
            jax.ShapeDtypeStruct((B, 2, F), jnp.float32),
        ],
        scratch_shapes=[pltpu.VMEM((2, N, F), jnp.float32)],          # mixed transforms
        compiler_params=pltpu.CompilerParams(
            dimension_semantics=("parallel", "arbitrary"),
            vmem_limit_bytes=vmem_limit),
        cost_estimate=cost,
    )(x, kmix, kp['w0'], kp['w1'], kp['wqt'], kp['bconv'], kp['wlx'], kp['wlm'], kp['blin'])

    # Finalize BatchNorm statistics (training-mode batch stats, biased variance).
    cnt = jnp.float32(B * N)
    sums = jnp.sum(stats, axis=0)                                     # (2, F)
    mean = sums[0] / cnt
    var = jnp.maximum(sums[1] / cnt - mean * mean, 0.0)
    scale = kp['gamma'] * jax.lax.rsqrt(var + 1e-5)
    shift = kp['beta'] - mean * scale

    return _bn_residual_apply(x, msg2, scale, shift, vmem_limit)


def init_params(key, feature_dim, num_layers):
    """Deterministic parameter init mirroring myWholeRGAT.__init__ shapes."""
    F = feature_dim
    params = []
    for _ in range(num_layers):
        key, *ks = jax.random.split(key, 9)
        # RGATConv(in=F, out=F, num_relations=2, heads=1, concat=False)
        w = jax.random.normal(ks[0], (2, F, F), jnp.float32) * 0.1     # (num_rel, F, F)
        q = jax.random.normal(ks[1], (F, 1), jnp.float32) * 0.1        # attention query proj
        k = jax.random.normal(ks[2], (F, 1), jnp.float32) * 0.1        # attention key proj
        bconv = jax.random.normal(ks[3], (F,), jnp.float32) * 0.1
        # nn.Linear(2F, F): weight (F, 2F), bias (F,)
        wlin = jax.random.normal(ks[4], (F, 2 * F), jnp.float32) * 0.1
        blin = jax.random.normal(ks[5], (F,), jnp.float32) * 0.1
        # BatchNorm(F) affine weight / bias
        gamma = 1.0 + jax.random.normal(ks[6], (F,), jnp.float32) * 0.01
        beta = jax.random.normal(ks[7], (F,), jnp.float32) * 0.01
        params.append(dict(w0=w[0], w1=w[1], q=q, k=k, bconv=bconv,
                           wlin=wlin, blin=blin, gamma=gamma, beta=beta))
    return params


def my_whole_rgat_forward(desc0, desc1, params, tile_i=None):
    """Mirror of myWholeRGAT.forward with edge_pool = [1]*num_layers."""
    B, F, n0 = desc0.shape
    n1 = desc1.shape[2]
    if tile_i is None:
        tile_i = _pick_row_tile(n0, n1)
    # x = cat([desc0, desc1], dim=2) ; permute(0, 2, 1) ; float()
    x = jnp.transpose(jnp.concatenate([desc0, desc1], axis=2), (0, 2, 1)).astype(jnp.float32)
    for p in params:
        kp = _prepare_kernel_params(p)
        x = rgat_layer(x, kp, n0=n0, tile_i=tile_i)
    x = jnp.transpose(x, (0, 2, 1))                                   # (B, F, N)
    return x[:, :, :n0], x[:, :, n0:]


# ---------- pure-JAX reference (same math, no Pallas) for a sanity check ----------
def _reference_layer(x, same, p):
    h0 = jnp.einsum('bnf,fg->bng', x, p['w0'])
    h1 = jnp.einsum('bnf,fg->bng', x, p['w1'])
    q0 = jnp.einsum('bng,gh->bnh', h0, p['q'])[..., 0]
    k0 = jnp.einsum('bng,gh->bnh', h0, p['k'])[..., 0]
    q1 = jnp.einsum('bng,gh->bnh', h1, p['q'])[..., 0]
    k1 = jnp.einsum('bng,gh->bnh', h1, p['k'])[..., 0]
    lrelu = lambda v: jnp.where(v > 0, v, 0.2 * v)
    logits = jnp.where(same[None] > 0,
                       lrelu(q0[:, :, None] + k0[:, None, :]),
                       lrelu(q1[:, :, None] + k1[:, None, :]))
    N = x.shape[1]
    diag = jnp.eye(N, dtype=bool)[None]
    logits = jnp.where(diag, -1e30, logits)
    e = jnp.exp(logits - jnp.max(logits, axis=-1, keepdims=True))
    e = jnp.where(diag, 0.0, e)
    attn = e / jnp.sum(e, axis=-1, keepdims=True)
    msg = (jnp.einsum('bij,bjf->bif', attn * same[None], h0)
           + jnp.einsum('bij,bjf->bif', attn * (1.0 - same[None]), h1))
    msg1 = jnp.maximum(msg + p['bconv'][None, None, :], 0.0)
    cat = jnp.concatenate([x, msg1], axis=-1)
    msg2 = jnp.einsum('bnk,fk->bnf', cat, p['wlin']) + p['blin'][None, None, :]
    mean = jnp.mean(msg2, axis=(0, 1), keepdims=True)
    var = jnp.mean((msg2 - mean) ** 2, axis=(0, 1), keepdims=True)
    msg3 = ((msg2 - mean) * jax.lax.rsqrt(var + 1e-5) * p['gamma'][None, None, :]
            + p['beta'][None, None, :])
    return x + msg3


def _reference_forward(desc0, desc1, params):
    B, F, n0 = desc0.shape
    n1 = desc1.shape[2]
    x = jnp.transpose(jnp.concatenate([desc0, desc1], axis=2), (0, 2, 1)).astype(jnp.float32)
    set_id = jnp.concatenate([jnp.zeros((n0,), jnp.int32), jnp.ones((n1,), jnp.int32)])
    same = (set_id[:, None] == set_id[None, :]).astype(jnp.float32)
    for p in params:
        x = _reference_layer(x, same, p)
    x = jnp.transpose(x, (0, 2, 1))
    return x[:, :, :n0], x[:, :, n0:]


if __name__ == "__main__":
    B, F, n0, n1 = 2, 32, 8, 8           # small shapes consistent with the module
    num_layers = 2                        # layer_names = ['self', 'cross'], pool = [1, 1]

    key = jax.random.PRNGKey(0)
    k_d0, k_d1, k_p = jax.random.split(key, 3)
    desc0 = jax.random.normal(k_d0, (B, F, n0), jnp.float32)
    desc1 = jax.random.normal(k_d1, (B, F, n1), jnp.float32)
    params = init_params(k_p, F, num_layers)

    fwd = jax.jit(my_whole_rgat_forward, static_argnames=("tile_i",))
    # auto tile -> tile_i=8, two row tiles per batch item: exercises the (B, T) grid, the
    # per-batch mixed-transform scratch caching at t==0 and the resident BN partial sums.
    out0, out1 = fwd(desc0, desc1, params)
    out0 = jax.block_until_ready(out0)
    out1 = jax.block_until_ready(out1)

    ref0, ref1 = _reference_forward(desc0, desc1, params)
    assert out0.shape == (B, F, n0) and out1.shape == (B, F, n1)
    assert np.all(np.isfinite(np.asarray(out0))) and np.all(np.isfinite(np.asarray(out1)))
    assert np.allclose(np.asarray(out0), np.asarray(ref0), rtol=2e-3, atol=2e-3)
    assert np.allclose(np.asarray(out1), np.asarray(ref1), rtol=2e-3, atol=2e-3)
    print("KERNEL_OK")
</pallas_src>

<mosaic_0001>
module attributes {stable_mosaic.version = 11 : i64} {
  func.func @_attn_linear_kernel(%arg0: i32, %arg1: i32, %arg2: memref<1x16x32xf32, #tpu.memory_space<vmem>>, %arg3: memref<1x2x16xf32, #tpu.memory_space<vmem>>, %arg4: memref<32x32xf32, #tpu.memory_space<vmem>>, %arg5: memref<32x32xf32, #tpu.memory_space<vmem>>, %arg6: memref<2x32xf32, #tpu.memory_space<vmem>>, %arg7: memref<1x32xf32, #tpu.memory_space<vmem>>, %arg8: memref<32x32xf32, #tpu.memory_space<vmem>>, %arg9: memref<32x32xf32, #tpu.memory_space<vmem>>, %arg10: memref<1x32xf32, #tpu.memory_space<vmem>>, %arg11: memref<1x8x32xf32, #tpu.memory_space<vmem>>, %arg12: memref<1x2x32xf32, #tpu.memory_space<vmem>>, %arg13: memref<2x16x32xf32, #tpu.memory_space<vmem>>) attributes {dimension_semantics = [#tpu.dimension_semantics<parallel>, #tpu.dimension_semantics<arbitrary>], iteration_bounds = array<i64: 2, 2>, scalar_prefetch = 0 : i64, scratch_operands = 1 : i64, tpu.core_type = #tpu.core_type<tc>, window_params = [{transform_indices = @transform_0, window_bounds = array<i64: 1, 16, 32>}, {transform_indices = @transform_1, window_bounds = array<i64: 1, 2, 16>}, {pipeline_mode = #tpu.pipeline_mode<synchronous>, transform_indices = @transform_2, window_bounds = array<i64: 32, 32>}, {pipeline_mode = #tpu.pipeline_mode<synchronous>, transform_indices = @transform_3, window_bounds = array<i64: 32, 32>}, {pipeline_mode = #tpu.pipeline_mode<synchronous>, transform_indices = @transform_4, window_bounds = array<i64: 2, 32>}, {pipeline_mode = #tpu.pipeline_mode<synchronous>, transform_indices = @transform_5, window_bounds = array<i64: 1, 32>}, {pipeline_mode = #tpu.pipeline_mode<synchronous>, transform_indices = @transform_6, window_bounds = array<i64: 32, 32>}, {pipeline_mode = #tpu.pipeline_mode<synchronous>, transform_indices = @transform_7, window_bounds = array<i64: 32, 32>}, {pipeline_mode = #tpu.pipeline_mode<synchronous>, transform_indices = @transform_8, window_bounds = array<i64: 1, 32>}, {transform_indices = @transform_9, window_bounds = array<i64: 1, 8, 32>}, {transform_indices = @transform_10, window_bounds = array<i64: 1, 2, 32>}]} {
    %c0_i32 = arith.constant 0 : i32
    %0 = arith.cmpi eq, %arg1, %c0_i32 : i32
    %1 = arith.extui %0 : i1 to i32
    %c0_i32_0 = arith.constant 0 : i32
    %2 = arith.cmpi ne, %1, %c0_i32_0 : i32
    scf.if %2 {
      %c0_47 = arith.constant 0 : index
      %c0_48 = arith.constant 0 : index
      %c0_49 = arith.constant 0 : index
      %98 = vector.load %arg2[%c0_47, %c0_48, %c0_49] : memref<1x16x32xf32, #tpu.memory_space<vmem>>, vector<1x16x32xf32>
      %99 = vector.shape_cast %98 : vector<1x16x32xf32> to vector<16x32xf32>
      %c0_50 = arith.constant 0 : index
      %c0_51 = arith.constant 0 : index
      %100 = vector.load %arg4[%c0_50, %c0_51] : memref<32x32xf32, #tpu.memory_space<vmem>>, vector<32x32xf32>
      %cst_52 = arith.constant dense<0.000000e+00> : vector<16x32xf32>
      %101 = tpu.matmul %99, %100, %cst_52 {dimension_numbers = #tpu.dot_dimension_numbers<[1], [0], [0], [1], [0, 0, 1, 1], [], []>} : vector<16x32xf32>, vector<32x32xf32>, vector<16x32xf32> -> vector<16x32xf32>
      %c0_53 = arith.constant 0 : index
      %c0_54 = arith.constant 0 : index
      %c0_55 = arith.constant 0 : index
      %102 = vector.load %arg2[%c0_53, %c0_54, %c0_55] : memref<1x16x32xf32, #tpu.memory_space<vmem>>, vector<1x16x32xf32>
      %103 = vector.shape_cast %102 : vector<1x16x32xf32> to vector<16x32xf32>
      %c0_56 = arith.constant 0 : index
      %c0_57 = arith.constant 0 : index
      %104 = vector.load %arg5[%c0_56, %c0_57] : memref<32x32xf32, #tpu.memory_space<vmem>>, vector<32x32xf32>
      %cst_58 = arith.constant dense<0.000000e+00> : vector<16x32xf32>
      %105 = tpu.matmul %103, %104, %cst_58 {dimension_numbers = #tpu.dot_dimension_numbers<[1], [0], [0], [1], [0, 0, 1, 1], [], []>} : vector<16x32xf32>, vector<32x32xf32>, vector<16x32xf32> -> vector<16x32xf32>
      %106 = vector.extract_strided_slice %101 {offsets = [0, 0], sizes = [8, 32], strides = [1, 1]} : vector<16x32xf32> to vector<8x32xf32>
      %c0_59 = arith.constant 0 : index
      %c0_60 = arith.constant 0 : index
      %c0_61 = arith.constant 0 : index
      %107 = vector.load %arg13[%c0_59, %c0_60, %c0_61] : memref<2x16x32xf32, #tpu.memory_space<vmem>>, vector<1x8x32xf32>
      %108 = vector.shape_cast %107 : vector<1x8x32xf32> to vector<8x32xf32>
      %109 = vector.shape_cast %106 : vector<8x32xf32> to vector<1x8x32xf32>
      tpu.vector_store %arg13[%c0_59, %c0_60, %c0_61], %109 {strides = array<i32>} : memref<2x16x32xf32, #tpu.memory_space<vmem>>, vector<1x8x32xf32>,
      %110 = vector.extract_strided_slice %105 {offsets = [8, 0], sizes = [8, 32], strides = [1, 1]} : vector<16x32xf32> to vector<8x32xf32>
      %c0_62 = arith.constant 0 : index
      %c8 = arith.constant 8 : index
      %c0_63 = arith.constant 0 : index
      %111 = vector.load %arg13[%c0_62, %c8, %c0_63] : memref<2x16x32xf32, #tpu.memory_space<vmem>>, vector<1x8x32xf32>
      %112 = vector.shape_cast %111 : vector<1x8x32xf32> to vector<8x32xf32>
      %113 = vector.shape_cast %110 : vector<8x32xf32> to vector<1x8x32xf32>
      tpu.vector_store %arg13[%c0_62, %c8, %c0_63], %113 {strides = array<i32>} : memref<2x16x32xf32, #tpu.memory_space<vmem>>, vector<1x8x32xf32>,
      %114 = vector.extract_strided_slice %105 {offsets = [0, 0], sizes = [8, 32], strides = [1, 1]} : vector<16x32xf32> to vector<8x32xf32>
      %c1_64 = arith.constant 1 : index
      %c0_65 = arith.constant 0 : index
      %c0_66 = arith.constant 0 : index
      %115 = vector.load %arg13[%c1_64, %c0_65, %c0_66] : memref<2x16x32xf32, #tpu.memory_space<vmem>>, vector<1x8x32xf32>
      %116 = vector.shape_cast %115 : vector<1x8x32xf32> to vector<8x32xf32>
      %117 = vector.shape_cast %114 : vector<8x32xf32> to vector<1x8x32xf32>
      tpu.vector_store %arg13[%c1_64, %c0_65, %c0_66], %117 {strides = array<i32>} : memref<2x16x32xf32, #tpu.memory_space<vmem>>, vector<1x8x32xf32>,
      %118 = vector.extract_strided_slice %101 {offsets = [8, 0], sizes = [8, 32], strides = [1, 1]} : vector<16x32xf32> to vector<8x32xf32>
      %c1_67 = arith.constant 1 : index
      %c8_68 = arith.constant 8 : index
      %c0_69 = arith.constant 0 : index
      %119 = vector.load %arg13[%c1_67, %c8_68, %c0_69] : memref<2x16x32xf32, #tpu.memory_space<vmem>>, vector<1x8x32xf32>
      %120 = vector.shape_cast %119 : vector<1x8x32xf32> to vector<8x32xf32>
      %121 = vector.shape_cast %118 : vector<8x32xf32> to vector<1x8x32xf32>
      tpu.vector_store %arg13[%c1_67, %c8_68, %c0_69], %121 {strides = array<i32>} : memref<2x16x32xf32, #tpu.memory_space<vmem>>, vector<1x8x32xf32>,
    } else {
    }
    %c0_i32_1 = arith.constant 0 : i32
    %3 = arith.cmpi eq, %arg1, %c0_i32_1 : i32
    %4 = arith.extui %3 : i1 to i32
    %c0_i32_2 = arith.constant 0 : i32
    %5 = arith.cmpi ne, %4, %c0_i32_2 : i32
    scf.if %5 {
      %cst_47 = arith.constant 0.000000e+00 : f32
      %98 = vector.broadcast %cst_47 : f32 to vector<2x32xf32>
      %c0_48 = arith.constant 0 : index
      %c0_49 = arith.constant 0 : index
      %c0_50 = arith.constant 0 : index
      %99 = vector.load %arg12[%c0_48, %c0_49, %c0_50] : memref<1x2x32xf32, #tpu.memory_space<vmem>>, vector<1x2x32xf32>
      %100 = vector.shape_cast %99 : vector<1x2x32xf32> to vector<2x32xf32>
      %101 = vector.shape_cast %98 : vector<2x32xf32> to vector<1x2x32xf32>
      tpu.vector_store %arg12[%c0_48, %c0_49, %c0_50], %101 {strides = array<i32>} : memref<1x2x32xf32, #tpu.memory_space<vmem>>, vector<1x2x32xf32>,
    } else {
    }
    %c8_i32 = arith.constant 8 : i32
    %6 = arith.muli %arg1, %c8_i32 : i32
    %7 = tpu.assume_multiple %6, 8 : i32
    %c0 = arith.constant 0 : index
    %8 = arith.index_cast %7 : i32 to index
    %c0_3 = arith.constant 0 : index
    %9 = vector.load %arg2[%c0, %8, %c0_3] : memref<1x16x32xf32, #tpu.memory_space<vmem>>, vector<1x8x32xf32>
    %10 = vector.shape_cast %9 : vector<1x8x32xf32> to vector<8x32xf32>
    %c0_4 = arith.constant 0 : index
    %c0_5 = arith.constant 0 : index
    %11 = vector.load %arg6[%c0_4, %c0_5] : memref<2x32xf32, #tpu.memory_space<vmem>>, vector<1x32xf32>
    %12 = vector.broadcast %11 : vector<1x32xf32> to vector<8x32xf32>
    %13 = arith.mulf %10, %12 : vector<8x32xf32>
    %cst = arith.constant dense<0.000000e+00> : vector<8xf32>
    %14 = vector.multi_reduction <add>, %13, %cst [1] : vector<8x32xf32> to vector<8xf32>
    %15 = vector.shape_cast %14 : vector<8xf32> to vector<8x1xf32>
    %c1 = arith.constant 1 : index
    %c0_6 = arith.constant 0 : index
    %16 = vector.load %arg6[%c1, %c0_6] : memref<2x32xf32, #tpu.memory_space<vmem>>, vector<1x32xf32>
    %17 = vector.broadcast %16 : vector<1x32xf32> to vector<8x32xf32>
    %18 = arith.mulf %10, %17 : vector<8x32xf32>
    %cst_7 = arith.constant dense<0.000000e+00> : vector<8xf32>
    %19 = vector.multi_reduction <add>, %18, %cst_7 [1] : vector<8x32xf32> to vector<8xf32>
    %20 = vector.shape_cast %19 : vector<8xf32> to vector<8x1xf32>
    %c8_i32_8 = arith.constant 8 : i32
    %21 = arith.cmpi sge, %7, %c8_i32_8 : i32
    %22 = arith.extui %21 : i1 to i32
    %23 = tpu.iota {dimensions = array<i32: 1>} : vector<1x16xi32>
    %c8_i32_9 = arith.constant 8 : i32
    %24 = vector.broadcast %c8_i32_9 : i32 to vector<1x16xi32>
    %25 = arith.cmpi sge, %23, %24 : vector<1x16xi32>
    %26 = vector.broadcast %21 : i1 to vector<1x16xi1>
    %27 = vector.broadcast %26 : vector<1x16xi1> to vector<1x16xi1>
    %28 = arith.xori %25, %27 : vector<1x16xi1>
    %cst_10 = arith.constant dense<true> : vector<1x16xi1>
    %29 = arith.xori %28, %cst_10 : vector<1x16xi1>
    %c0_11 = arith.constant 0 : index
    %c1_12 = arith.constant 1 : index
    %c0_13 = arith.constant 0 : index
    %30 = vector.load %arg3[%c0_11, %c1_12, %c0_13] : memref<1x2x16xf32, #tpu.memory_space<vmem>>, vector<1x1x16xf32>
    %31 = vector.shape_cast %30 : vector<1x1x16xf32> to vector<1x16xf32>
    %c0_14 = arith.constant 0 : index
    %c0_15 = arith.constant 0 : index
    %c0_16 = arith.constant 0 : index
    %32 = vector.load %arg3[%c0_14, %c0_15, %c0_16] : memref<1x2x16xf32, #tpu.memory_space<vmem>>, vector<1x1x16xf32>
    %33 = vector.shape_cast %32 : vector<1x1x16xf32> to vector<1x16xf32>
    %34 = arith.select %21, %31, %33 : vector<1x16xf32>
    %35 = vector.shape_cast %29 : vector<1x16xi1> to vector<1x16xi1>
    %36 = vector.broadcast %35 : vector<1x16xi1> to vector<8x16xi1>
    %37 = vector.shape_cast %15 : vector<8x1xf32> to vector<8x1xf32>
    %38 = vector.broadcast %37 : vector<8x1xf32> to vector<8x16xf32>
    %39 = vector.shape_cast %20 : vector<8x1xf32> to vector<8x1xf32>
    %40 = vector.broadcast %39 : vector<8x1xf32> to vector<8x16xf32>
    %41 = arith.select %36, %38, %40 : vector<8x16xi1>, vector<8x16xf32>
    %42 = vector.broadcast %34 : vector<1x16xf32> to vector<8x16xf32>
    %43 = arith.addf %41, %42 : vector<8x16xf32>
    %cst_17 = arith.constant 0.000000e+00 : f32
    %44 = vector.broadcast %cst_17 : f32 to vector<8x16xf32>
    %45 = arith.cmpf ogt, %43, %44 : vector<8x16xf32>
    %cst_18 = arith.constant 2.000000e-01 : f32
    %46 = vector.broadcast %cst_18 : f32 to vector<8x16xf32>
    %47 = arith.mulf %46, %43 : vector<8x16xf32>
    %48 = arith.select %45, %43, %47 : vector<8x16xi1>, vector<8x16xf32>
    %49 = tpu.iota {dimensions = array<i32: 0>} : vector<8x16xi32>
    %50 = vector.broadcast %7 : i32 to vector<8x16xi32>
    %51 = arith.addi %50, %49 : vector<8x16xi32>
    %52 = tpu.iota {dimensions = array<i32: 1>} : vector<8x16xi32>
    %53 = arith.cmpi eq, %51, %52 : vector<8x16xi32>
    %cst_19 = arith.constant -1.000000e+30 : f32
    %54 = vector.broadcast %cst_19 : f32 to vector<8x16xf32>
    %55 = arith.select %53, %54, %48 : vector<8x16xi1>, vector<8x16xf32>
    %cst_20 = arith.constant dense<0xFF800000> : vector<8xf32>
    %56 = vector.multi_reduction <maximumf>, %55, %cst_20 [1] : vector<8x16xf32> to vector<8xf32>
    %57 = vector.shape_cast %56 : vector<8xf32> to vector<8x1xf32>
    %58 = vector.broadcast %57 : vector<8x1xf32> to vector<8x16xf32>
    %59 = arith.subf %55, %58 : vector<8x16xf32>
    %60 = math.exp %59 : vector<8x16xf32>
    %cst_21 = arith.constant dense<0.000000e+00> : vector<8xf32>
    %61 = vector.multi_reduction <add>, %60, %cst_21 [1] : vector<8x16xf32> to vector<8xf32>
    %62 = vector.shape_cast %61 : vector<8xf32> to vector<8x1xf32>
    %63 = tpu.reciprocal %62 {approx = true} : vector<8x1xf32> -> vector<8x1xf32>
    %64 = vector.broadcast %63 : vector<8x1xf32> to vector<8x16xf32>
    %65 = arith.mulf %60, %64 : vector<8x16xf32>
    %66 = arith.index_cast %22 : i32 to index
    %c0_22 = arith.constant 0 : index
    %c0_23 = arith.constant 0 : index
    %67 = vector.load %arg13[%66, %c0_22, %c0_23] : memref<2x16x32xf32, #tpu.memory_space<vmem>>, vector<1x16x32xf32>
    %68 = vector.shape_cast %67 : vector<1x16x32xf32> to vector<16x32xf32>
    %cst_24 = arith.constant dense<0.000000e+00> : vector<8x32xf32>
    %69 = tpu.matmul %65, %68, %cst_24 {dimension_numbers = #tpu.dot_dimension_numbers<[1], [0], [0], [1], [0, 0, 1, 1], [], []>} : vector<8x16xf32>, vector<16x32xf32>, vector<8x32xf32> -> vector<8x32xf32>
    %c0_25 = arith.constant 0 : index
    %c0_26 = arith.constant 0 : index
    %70 = vector.load %arg7[%c0_25, %c0_26] : memref<1x32xf32, #tpu.memory_space<vmem>>, vector<1x32xf32>
    %71 = vector.broadcast %70 : vector<1x32xf32> to vector<8x32xf32>
    %72 = arith.addf %69, %71 : vector<8x32xf32>
    %cst_27 = arith.constant 0.000000e+00 : f32
    %73 = vector.broadcast %cst_27 : f32 to vector<8x32xf32>
    %74 = arith.maximumf %72, %73 : vector<8x32xf32>
    %c0_28 = arith.constant 0 : index
    %c0_29 = arith.constant 0 : index
    %75 = vector.load %arg8[%c0_28, %c0_29] : memref<32x32xf32, #tpu.memory_space<vmem>>, vector<32x32xf32>
    %cst_30 = arith.constant dense<0.000000e+00> : vector<8x32xf32>
    %76 = tpu.matmul %10, %75, %cst_30 {dimension_numbers = #tpu.dot_dimension_numbers<[1], [0], [0], [1], [0, 0, 1, 1], [], []>} : vector<8x32xf32>, vector<32x32xf32>, vector<8x32xf32> -> vector<8x32xf32>
    %c0_31 = arith.constant 0 : index
    %c0_32 = arith.constant 0 : index
    %77 = vector.load %arg9[%c0_31, %c0_32] : memref<32x32xf32, #tpu.memory_space<vmem>>, vector<32x32xf32>
    %cst_33 = arith.constant dense<0.000000e+00> : vector<8x32xf32>
    %78 = tpu.matmul %74, %77, %cst_33 {dimension_numbers = #tpu.dot_dimension_numbers<[1], [0], [0], [1], [0, 0, 1, 1], [], []>} : vector<8x32xf32>, vector<32x32xf32>, vector<8x32xf32> -> vector<8x32xf32>
    %79 = arith.addf %76, %78 : vector<8x32xf32>
    %c0_34 = arith.constant 0 : index
    %c0_35 = arith.constant 0 : index
    %80 = vector.load %arg10[%c0_34, %c0_35] : memref<1x32xf32, #tpu.memory_space<vmem>>, vector<1x32xf32>
    %81 = vector.broadcast %80 : vector<1x32xf32> to vector<8x32xf32>
    %82 = arith.addf %79, %81 : vector<8x32xf32>
    %c0_36 = arith.constant 0 : index
    %c0_37 = arith.constant 0 : index
    %c0_38 = arith.constant 0 : index
    %83 = vector.load %arg11[%c0_36, %c0_37, %c0_38] : memref<1x8x32xf32, #tpu.memory_space<vmem>>, vector<1x8x32xf32>
    %84 = vector.shape_cast %83 : vector<1x8x32xf32> to vector<8x32xf32>
    %85 = vector.shape_cast %82 : vector<8x32xf32> to vector<1x8x32xf32>
    tpu.vector_store %arg11[%c0_36, %c0_37, %c0_38], %85 {strides = array<i32>} : memref<1x8x32xf32, #tpu.memory_space<vmem>>, vector<1x8x32xf32>,
    %cst_39 = arith.constant dense<0.000000e+00> : vector<32xf32>
    %86 = vector.multi_reduction <add>, %82, %cst_39 [0] : vector<8x32xf32> to vector<32xf32>
    %87 = vector.shape_cast %86 : vector<32xf32> to vector<1x32xf32>
    %88 = arith.mulf %82, %82 : vector<8x32xf32>
    %cst_40 = arith.constant dense<0.000000e+00> : vector<32xf32>
    %89 = vector.multi_reduction <add>, %88, %cst_40 [0] : vector<8x32xf32> to vector<32xf32>
    %90 = vector.shape_cast %89 : vector<32xf32> to vector<1x32xf32>
    %c0_41 = arith.constant 0 : index
    %c0_42 = arith.constant 0 : index
    %c0_43 = arith.constant 0 : index
    %91 = vector.load %arg12[%c0_41, %c0_42, %c0_43] : memref<1x2x32xf32, #tpu.memory_space<vmem>>, vector<1x2x32xf32>
    %92 = vector.shape_cast %91 : vector<1x2x32xf32> to vector<2x32xf32>
    %93 = tpu.concatenate %87, %90 in 0 : vector<1x32xf32>, vector<1x32xf32> -> vector<2x32xf32>
    %94 = arith.addf %92, %93 : vector<2x32xf32>
    %c0_44 = arith.constant 0 : index
    %c0_45 = arith.constant 0 : index
    %c0_46 = arith.constant 0 : index
    %95 = vector.load %arg12[%c0_44, %c0_45, %c0_46] : memref<1x2x32xf32, #tpu.memory_space<vmem>>, vector<1x2x32xf32>
    %96 = vector.shape_cast %95 : vector<1x2x32xf32> to vector<2x32xf32>
    %97 = vector.shape_cast %94 : vector<2x32xf32> to vector<1x2x32xf32>
    tpu.vector_store %arg12[%c0_44, %c0_45, %c0_46], %97 {strides = array<i32>} : memref<1x2x32xf32, #tpu.memory_space<vmem>>, vector<1x2x32xf32>,
    return
  }
  func.func @transform_0(%arg0: i32, %arg1: i32) -> (i32, i32, i32) {
    %c0_i32 = arith.constant 0 : i32
    %c0_i32_0 = arith.constant 0 : i32
    %c0_i32_1 = arith.constant 0 : i32
    return %arg0, %c0_i32, %c0_i32_0 : i32, i32, i32
  }
  func.func @transform_1(%arg0: i32, %arg1: i32) -> (i32, i32, i32) {
    %c0_i32 = arith.constant 0 : i32
    %c0_i32_0 = arith.constant 0 : i32
    %c0_i32_1 = arith.constant 0 : i32
    return %arg0, %c0_i32, %c0_i32_0 : i32, i32, i32
  }
  func.func @transform_2(%arg0: i32, %arg1: i32) -> (i32, i32) {
    %c0_i32 = arith.constant 0 : i32
    %c0_i32_0 = arith.constant 0 : i32
    %c0_i32_1 = arith.constant 0 : i32
    return %c0_i32, %c0_i32_0 : i32, i32
  }
  func.func @transform_3(%arg0: i32, %arg1: i32) -> (i32, i32) {
    %c0_i32 = arith.constant 0 : i32
    %c0_i32_0 = arith.constant 0 : i32
    %c0_i32_1 = arith.constant 0 : i32
    return %c0_i32, %c0_i32_0 : i32, i32
  }
  func.func @transform_4(%arg0: i32, %arg1: i32) -> (i32, i32) {
    %c0_i32 = arith.constant 0 : i32
    %c0_i32_0 = arith.constant 0 : i32
    %c0_i32_1 = arith.constant 0 : i32
    return %c0_i32, %c0_i32_0 : i32, i32
  }
  func.func @transform_5(%arg0: i32, %arg1: i32) -> (i32, i32) {
    %c0_i32 = arith.constant 0 : i32
    %c0_i32_0 = arith.constant 0 : i32
    %c0_i32_1 = arith.constant 0 : i32
    return %c0_i32, %c0_i32_0 : i32, i32
  }
  func.func @transform_6(%arg0: i32, %arg1: i32) -> (i32, i32) {
    %c0_i32 = arith.constant 0 : i32
    %c0_i32_0 = arith.constant 0 : i32
    %c0_i32_1 = arith.constant 0 : i32
    return %c0_i32, %c0_i32_0 : i32, i32
  }
  func.func @transform_7(%arg0: i32, %arg1: i32) -> (i32, i32) {
    %c0_i32 = arith.constant 0 : i32
    %c0_i32_0 = arith.constant 0 : i32
    %c0_i32_1 = arith.constant 0 : i32
    return %c0_i32, %c0_i32_0 : i32, i32
  }
  func.func @transform_8(%arg0: i32, %arg1: i32) -> (i32, i32) {
    %c0_i32 = arith.constant 0 : i32
    %c0_i32_0 = arith.constant 0 : i32
    %c0_i32_1 = arith.constant 0 : i32
    return %c0_i32, %c0_i32_0 : i32, i32
  }
  func.func @transform_9(%arg0: i32, %arg1: i32) -> (i32, i32, i32) {
    %c0_i32 = arith.constant 0 : i32
    %c0_i32_0 = arith.constant 0 : i32
    return %arg0, %arg1, %c0_i32 : i32, i32, i32
  }
  func.func @transform_10(%arg0: i32, %arg1: i32) -> (i32, i32, i32) {
    %c0_i32 = arith.constant 0 : i32
    %c0_i32_0 = arith.constant 0 : i32
    %c0_i32_1 = arith.constant 0 : i32
    return %arg0, %c0_i32, %c0_i32_0 : i32, i32, i32
  }
}

module attributes {stable_mosaic.version = 11 : i64} {
  func.func @_bn_residual_kernel(%arg0: i32, %arg1: memref<1x4x128xf32, #tpu.memory_space<vmem>>, %arg2: memref<1x4x128xf32, #tpu.memory_space<vmem>>, %arg3: memref<4x128xf32, #tpu.memory_space<vmem>>, %arg4: memref<4x128xf32, #tpu.memory_space<vmem>>, %arg5: memref<1x4x128xf32, #tpu.memory_space<vmem>>) attributes {dimension_semantics = [#tpu.dimension_semantics<parallel>], iteration_bounds = array<i64: 2>, scalar_prefetch = 0 : i64, scratch_operands = 0 : i64, tpu.core_type = #tpu.core_type<tc>, window_params = [{transform_indices = @transform_0, window_bounds = array<i64: 1, 4, 128>}, {transform_indices = @transform_1, window_bounds = array<i64: 1, 4, 128>}, {pipeline_mode = #tpu.pipeline_mode<synchronous>, transform_indices = @transform_2, window_bounds = array<i64: 4, 128>}, {pipeline_mode = #tpu.pipeline_mode<synchronous>, transform_indices = @transform_3, window_bounds = array<i64: 4, 128>}, {transform_indices = @transform_4, window_bounds = array<i64: 1, 4, 128>}]} {
    %c0 = arith.constant 0 : index
    %c0_0 = arith.constant 0 : index
    %c0_1 = arith.constant 0 : index
    %0 = vector.load %arg1[%c0, %c0_0, %c0_1] : memref<1x4x128xf32, #tpu.memory_space<vmem>>, vector<1x4x128xf32>
    %1 = vector.shape_cast %0 : vector<1x4x128xf32> to vector<4x128xf32>
    %c0_2 = arith.constant 0 : index
    %c0_3 = arith.constant 0 : index
    %c0_4 = arith.constant 0 : index
    %2 = vector.load %arg2[%c0_2, %c0_3, %c0_4] : memref<1x4x128xf32, #tpu.memory_space<vmem>>, vector<1x4x128xf32>
    %3 = vector.shape_cast %2 : vector<1x4x128xf32> to vector<4x128xf32>
    %c0_5 = arith.constant 0 : index
    %c0_6 = arith.constant 0 : index
    %4 = vector.load %arg3[%c0_5, %c0_6] : memref<4x128xf32, #tpu.memory_space<vmem>>, vector<4x128xf32>
    %5 = arith.mulf %3, %4 : vector<4x128xf32>
    %6 = arith.addf %1, %5 : vector<4x128xf32>
    %c0_7 = arith.constant 0 : index
    %c0_8 = arith.constant 0 : index
    %7 = vector.load %arg4[%c0_7, %c0_8] : memref<4x128xf32, #tpu.memory_space<vmem>>, vector<4x128xf32>
    %8 = arith.addf %6, %7 : vector<4x128xf32>
    %c0_9 = arith.constant 0 : index
    %c0_10 = arith.constant 0 : index
    %c0_11 = arith.constant 0 : index
    %9 = vector.load %arg5[%c0_9, %c0_10, %c0_11] : memref<1x4x128xf32, #tpu.memory_space<vmem>>, vector<1x4x128xf32>
    %10 = vector.shape_cast %9 : vector<1x4x128xf32> to vector<4x128xf32>
    %11 = vector.shape_cast %8 : vector<4x128xf32> to vector<1x4x128xf32>
    tpu.vector_store %arg5[%c0_9, %c0_10, %c0_11], %11 {strides = array<i32>} : memref<1x4x128xf32, #tpu.memory_space<vmem>>, vector<1x4x128xf32>,
    return
  }
  func.func @transform_0(%arg0: i32) -> (i32, i32, i32) {
    %c0_i32 = arith.constant 0 : i32
    %c0_i32_0 = arith.constant 0 : i32
    %c0_i32_1 = arith.constant 0 : i32
    return %arg0, %c0_i32, %c0_i32_0 : i32, i32, i32
  }
  func.func @transform_1(%arg0: i32) -> (i32, i32, i32) {
    %c0_i32 = arith.constant 0 : i32
    %c0_i32_0 = arith.constant 0 : i32
    %c0_i32_1 = arith.constant 0 : i32
    return %arg0, %c0_i32, %c0_i32_0 : i32, i32, i32
  }
  func.func @transform_2(%arg0: i32) -> (i32, i32) {
    %c0_i32 = arith.constant 0 : i32
    %c0_i32_0 = arith.constant 0 : i32
    %c0_i32_1 = arith.constant 0 : i32
    return %c0_i32, %c0_i32_0 : i32, i32
  }
  func.func @transform_3(%arg0: i32) -> (i32, i32) {
    %c0_i32 = arith.constant 0 : i32
    %c0_i32_0 = arith.constant 0 : i32
    %c0_i32_1 = arith.constant 0 : i32
    return %c0_i32, %c0_i32_0 : i32, i32
  }
  func.func @transform_4(%arg0: i32) -> (i32, i32, i32) {
    %c0_i32 = arith.constant 0 : i32
    %c0_i32_0 = arith.constant 0 : i32
    %c0_i32_1 = arith.constant 0 : i32
    return %arg0, %c0_i32, %c0_i32_0 : i32, i32, i32
  }
}

</mosaic_0001>

<llo_original>
// kernel: my_whole_rgat_forward.5
$region0: #{my_whole_rgat_forward.5}
  #allocation0 [shape = 'u32[]', space=smem, size = 0x4, offset = 0x4, fixed_abs, tag = 'smem constant byte address 0x4 - core index']
  #allocation1 [shape = 'u32[72,128]{1,0:T(1,128)}', space=vmem, size = 0x9000, scoped, tag = 'internal scratch']
  %s0 = inlined_call_operand.vmem [shape: f32[2,4,128], index: 0, kind: input, shape index: {}, may-alias: {0,4}]
  %s1 = inlined_call_operand.vmem [shape: f32[2,4,128], index: 1, kind: input, shape index: {}]
  %s2 = inlined_call_operand.vmem [shape: f32[4,128], index: 2, kind: input, shape index: {}]
  %s3 = inlined_call_operand.vmem [shape: f32[4,128], index: 3, kind: input, shape index: {}]
  %s4 = inlined_call_operand.vmem [shape: f32[2,4,128], index: 4, kind: output, shape index: {}, may-alias: {0,4}]
  %s5 = sld [smem:[#allocation0]]
  $region49: #{my_whole_rgat_forward.5} parent=0
    _
  %s7 = ssub.s32 1, %s5
  %s8 = scalar_select 0, %s7, %s5
  loop: start=0, step=1, limit=4
  $region2: #{my_whole_rgat_forward.5} parent=0 // loop_pre_header
    _
  $region3: #{my_whole_rgat_forward.5} parent=0 // loop_header
    %s10 = sphi 0, %s14
    %p11 = scmp.ge.s32.totalorder %s10, 4
    %s20 = sphi 0, %s22
    %s23 = sphi 0, %s20
    %s24 = sphi 0, %s23
    %s40 = sphi 0, %s24
    %s46 = sphi 0, %s48
    %s49 = sphi 0, %s46
    %s50 = sphi 0, %s49
    %s66 = sphi 0, %s50
    %s70 = sphi 0, %s70
    %s72 = sphi 0, %s70
    %s73 = sphi 0, %s72
    %s87 = sphi 0, %s73
    %s91 = sphi 0, %s91
    %s93 = sphi 0, %s91
    %s94 = sphi 0, %s93
    %s108 = sphi 0, %s94
    %s114 = sphi 0, %s116
    %s117 = sphi 0, %s114
    %s118 = sphi 0, %s117
    %s134 = sphi 0, %s118
  $region4: #{my_whole_rgat_forward.5} parent=0 // loop_header_branch
    %13 = sbr.rel (%p11) target = $region8
  $region5: #{my_whole_rgat_forward.5} parent=0 // loop_body
    %s15 = ssub.s32 %s10, 1
    %s16 = ssub.s32 %s10, 2
    %s17 = sadd.s32 %s10, 1
    %s18 = ssub.s32 %s10, %s17
    %p19 = scmp.eq.s32.totalorder %s18, 0
    %s21 = sadd.s32 %s20, 1
    %s22 = scalar_select %p19, %s20, %s21
    %p25 = pneg %p19
    %p26 = scmp.eq.s32.totalorder %s10, 1
    %p27 = por %p25, %p26
    %p28 = scmp.ne.s32.totalorder %s20, %s23
    %p29 = scmp.eq.s32.totalorder %s10, 0
    %p30 = por %p28, %p29
    %p31 = scmp.ne.s32.totalorder %s20, %s23
    %p32 = scmp.eq.s32.totalorder %s15, 1
    %p33 = por %p31, %p32
    %p34 = scmp.ne.s32.totalorder %s23, %s24
    %p35 = scmp.eq.s32.totalorder %s15, 0
    %p36 = por %p34, %p35
    %p37 = scmp.ne.s32.totalorder %s23, %s24
    %p38 = scmp.eq.s32.totalorder %s16, 1
    %p39 = por %p37, %p38
    %p41 = scmp.ne.s32.totalorder %s24, %s40
    %p42 = scmp.eq.s32.totalorder %s16, 0
    %p43 = por %p41, %p42
    %s44 = ssub.s32 %s10, %s17
    %p45 = scmp.eq.s32.totalorder %s44, 0
    %s47 = sadd.s32 %s46, 1
    %s48 = scalar_select %p45, %s46, %s47
    %p51 = pneg %p45
    %p52 = scmp.eq.s32.totalorder %s10, 1
    %p53 = por %p51, %p52
    %p54 = scmp.ne.s32.totalorder %s46, %s49
    %p55 = scmp.eq.s32.totalorder %s10, 0
    %p56 = por %p54, %p55
    %p57 = scmp.ne.s32.totalorder %s46, %s49
    %p58 = scmp.eq.s32.totalorder %s15, 1
    %p59 = por %p57, %p58
    %p60 = scmp.ne.s32.totalorder %s49, %s50
    %p61 = scmp.eq.s32.totalorder %s15, 0
    %p62 = por %p60, %p61
    %p63 = scmp.ne.s32.totalorder %s49, %s50
    %p64 = scmp.eq.s32.totalorder %s16, 1
    %p65 = por %p63, %p64
    %p67 = scmp.ne.s32.totalorder %s50, %s66
    %p68 = scmp.eq.s32.totalorder %s16, 0
    %p69 = por %p67, %p68
    %s71 = sadd.s32 %s70, 1
    %p74 = scmp.eq.s32.totalorder %s10, 1
    %p75 = scmp.ne.s32.totalorder %s70, %s72
    %p76 = scmp.eq.s32.totalorder %s10, 0
    %p77 = por %p75, %p76
    %p78 = scmp.ne.s32.totalorder %s70, %s72
    %p79 = scmp.eq.s32.totalorder %s15, 1
    %p80 = por %p78, %p79
    %p81 = scmp.ne.s32.totalorder %s72, %s73
    %p82 = scmp.eq.s32.totalorder %s15, 0
    %p83 = por %p81, %p82
    %p84 = scmp.ne.s32.totalorder %s72, %s73
    %p85 = scmp.eq.s32.totalorder %s16, 1
    %p86 = por %p84, %p85
    %p88 = scmp.ne.s32.totalorder %s73, %s87
    %p89 = scmp.eq.s32.totalorder %s16, 0
    %p90 = por %p88, %p89
    %s92 = sadd.s32 %s91, 1
    %p95 = scmp.eq.s32.totalorder %s10, 1
    %p96 = scmp.ne.s32.totalorder %s91, %s93
    %p97 = scmp.eq.s32.totalorder %s10, 0
    %p98 = por %p96, %p97
    %p99 = scmp.ne.s32.totalorder %s91, %s93
    %p100 = scmp.eq.s32.totalorder %s15, 1
    %p101 = por %p99, %p100
    %p102 = scmp.ne.s32.totalorder %s93, %s94
    %p103 = scmp.eq.s32.totalorder %s15, 0
    %p104 = por %p102, %p103
    %p105 = scmp.ne.s32.totalorder %s93, %s94
    %p106 = scmp.eq.s32.totalorder %s16, 1
    %p107 = por %p105, %p106
    %p109 = scmp.ne.s32.totalorder %s94, %s108
    %p110 = scmp.eq.s32.totalorder %s16, 0
    %p111 = por %p109, %p110
    %s112 = ssub.s32 %s10, %s17
    %p113 = scmp.eq.s32.totalorder %s112, 0
    %s115 = sadd.s32 %s114, 1
    %s116 = scalar_select %p113, %s114, %s115
    %p119 = pneg %p113
    %p120 = scmp.eq.s32.totalorder %s10, 1
    %p121 = por %p119, %p120
    %p122 = scmp.ne.s32.totalorder %s114, %s117
    %p123 = scmp.eq.s32.totalorder %s10, 0
    %p124 = por %p122, %p123
    %p125 = scmp.ne.s32.totalorder %s114, %s117
    %p126 = scmp.eq.s32.totalorder %s15, 1
    %p127 = por %p125, %p126
    %p128 = scmp.ne.s32.totalorder %s117, %s118
    %p129 = scmp.eq.s32.totalorder %s15, 0
    %p130 = por %p128, %p129
    %p131 = scmp.ne.s32.totalorder %s117, %s118
    %p132 = scmp.eq.s32.totalorder %s16, 1
    %p133 = por %p131, %p132
    %p135 = scmp.ne.s32.totalorder %s118, %s134
    %p136 = scmp.eq.s32.totalorder %s16, 0
    %p137 = por %p135, %p136
    %p138 = scmp.le.s32.totalorder 1, %s10
    %p139 = scmp.lt.s32.totalorder %s10, 3
    %p140 = pnand %p138, %p139
    %p141 = pneg %p140
    // Predicated region
    $region9: #{my_whole_rgat_forward.5} parent=5 // pred_check
      _
    $region10: #{my_whole_rgat_forward.5} parent=5 // pred_check_branch
      %143 = sbr.rel (%p140) target = $region12
    $region11: #{my_whole_rgat_forward.5} parent=5 // pred_region
      %s144 = ssub.s32 %s10, 1
      // Predicated region
      $region13: #{my_whole_rgat_forward.5} parent=11 // pred_check
        %p145 = pneg %p83
      $region14: #{my_whole_rgat_forward.5} parent=11 // pred_check_branch
        %147 = sbr.rel (%p145) target = $region16
      $region15: #{my_whole_rgat_forward.5} parent=11 // pred_region
        _
      $region16: #{my_whole_rgat_forward.5} parent=11 // pred_fallthru
        _
      // Predicated region
      $region17: #{my_whole_rgat_forward.5} parent=11 // pred_check
        %p148 = pneg %p104
      $region18: #{my_whole_rgat_forward.5} parent=11 // pred_check_branch
        %150 = sbr.rel (%p148) target = $region20
      $region19: #{my_whole_rgat_forward.5} parent=11 // pred_region
        _
      $region20: #{my_whole_rgat_forward.5} parent=11 // pred_fallthru
        _
    $region12: #{my_whole_rgat_forward.5} parent=5 // pred_fallthru
      _
    %p151 = scmp.lt.s32.totalorder %s10, 2
    // Predicated region
    $region21: #{my_whole_rgat_forward.5} parent=5 // pred_check
      %p152 = pneg %p151
    $region22: #{my_whole_rgat_forward.5} parent=5 // pred_check_branch
      %154 = sbr.rel (%p152) target = $region24
    $region23: #{my_whole_rgat_forward.5} parent=5 // pred_region
      // Predicated region
      $region25: #{my_whole_rgat_forward.5} parent=23 // pred_check
        %p155 = pneg %p30
      $region26: #{my_whole_rgat_forward.5} parent=23 // pred_check_branch
        %157 = sbr.rel (%p155) target = $region28
      $region27: #{my_whole_rgat_forward.5} parent=23 // pred_region
        %p158 = scmp.lt.s32.totalorder %s10, 1
        %s159 = scalar_select %p158, %s10, 1
        %s160 = smul.addr %s159, 4
        %s161 = scalar_lea.vmem %s0, %s160
      $region28: #{my_whole_rgat_forward.5} parent=23 // pred_fallthru
        _
      // Predicated region
      $region29: #{my_whole_rgat_forward.5} parent=23 // pred_check
        %p162 = pneg %p56
      $region30: #{my_whole_rgat_forward.5} parent=23 // pred_check_branch
        %164 = sbr.rel (%p162) target = $region32
      $region31: #{my_whole_rgat_forward.5} parent=23 // pred_region
        %p165 = scmp.lt.s32.totalorder %s10, 1
        %s166 = scalar_select %p165, %s10, 1
        %s167 = smul.addr %s166, 4
        %s168 = scalar_lea.vmem %s1, %s167
      $region32: #{my_whole_rgat_forward.5} parent=23 // pred_fallthru
        _
    $region24: #{my_whole_rgat_forward.5} parent=5 // pred_fallthru
      _
    %p169 = scmp.le.s32.totalorder 1, %s10
    %p170 = scmp.lt.s32.totalorder %s10, 3
    %p171 = pnand %p169, %p170
    %p172 = pneg %p171
    // Predicated region
    $region33: #{my_whole_rgat_forward.5} parent=5 // pred_check
      _
    $region34: #{my_whole_rgat_forward.5} parent=5 // pred_check_branch
      %174 = sbr.rel (%p171) target = $region36
    $region35: #{my_whole_rgat_forward.5} parent=5 // pred_region
      %s175 = ssub.s32 %s10, 1
      %p176 = scmp.lt.s32.totalorder %s15, 1
      %s177 = scalar_select %p176, %s15, 1
      %s178 = smul.addr %s177, 4
      %s179 = scalar_lea.vmem %s0, %s178
      %p180 = pneg %p36
      %p181 = pneg %p33
      %p182 = scmp.lt.s32.totalorder %s15, 1
      %s183 = scalar_select %p182, %s15, 1
      %s184 = smul.addr %s183, 4
      %s185 = scalar_lea.vmem %s1, %s184
      %p186 = pneg %p62
      %p187 = pneg %p59
      %p188 = pneg %p83
      %p189 = pneg %p80
      %p190 = pneg %p104
      %p191 = pneg %p101
      %p192 = pneg %p130
      %p193 = pneg %p127
      %p194 = scmp.lt.s32.totalorder %s15, 1
      %s195 = scalar_select %p194, %s15, 1
      %s196 = smul.addr %s195, 4
      %s197 = scalar_lea.vmem %s4, %s196
      %p198 = scmp.lt.s32.totalorder %s15, 1
      %s199 = scalar_select %p198, %s15, 1
      %s200 = smul.addr %s199, 4
      %s201 = scalar_lea.vmem %s0, %s200
      %p202 = scmp.lt.s32.totalorder %s15, 1
      %s203 = scalar_select %p202, %s15, 1
      %s204 = smul.addr %s203, 4
      %s205 = scalar_lea.vmem %s1, %s204
      %p206 = scmp.lt.s32.totalorder %s15, 1
      %s207 = scalar_select %p206, %s15, 1
      %s208 = smul.addr %s207, 4
      %s209 = scalar_lea.vmem %s4, %s208
      %v210 = vld [vmem:[%s201] sm:$0xf]
      %v211 = vld [vmem:[%s205] sm:$0xf]
      %v212 = vld [vmem:[%s2] sm:$0xf]
      %v213 = vmul.f32 %v211, %v212
      %v214 = vadd.f32 %v210, %v213
      %v215 = vld [vmem:[%s3] sm:$0xf]
      %v216 = vadd.f32 %v214, %v215
      %217 = vst [vmem:[%s209] sm:$0xf] %v216
      %p218 = scmp.lt.s32.totalorder %s15, 1
      %s219 = scalar_select %p218, %s15, 1
      %s220 = smul.addr %s219, 4
      %s221 = scalar_lea.vmem %s4, %s220
      // Predicated region
      $region37: #{my_whole_rgat_forward.5} parent=35 // pred_check
        %p222 = pneg %p127
      $region38: #{my_whole_rgat_forward.5} parent=35 // pred_check_branch
        %224 = sbr.rel (%p222) target = $region40
      $region39: #{my_whole_rgat_forward.5} parent=35 // pred_region
        _
      $region40: #{my_whole_rgat_forward.5} parent=35 // pred_fallthru
        _
    $region36: #{my_whole_rgat_forward.5} parent=5 // pred_fallthru
      _
    %p225 = scmp.le.s32.totalorder 2, %s10
    // Predicated region
    $region41: #{my_whole_rgat_forward.5} parent=5 // pred_check
      %p226 = pneg %p225
    $region42: #{my_whole_rgat_forward.5} parent=5 // pred_check_branch
      %228 = sbr.rel (%p226) target = $region44
    $region43: #{my_whole_rgat_forward.5} parent=5 // pred_region
      %s229 = ssub.s32 %s10, 2
      // Predicated region
      $region45: #{my_whole_rgat_forward.5} parent=43 // pred_check
        %p230 = pneg %p133
      $region46: #{my_whole_rgat_forward.5} parent=43 // pred_check_branch
        %232 = sbr.rel (%p230) target = $region48
      $region47: #{my_whole_rgat_forward.5} parent=43 // pred_region
        %p233 = scmp.lt.s32.totalorder %s16, 1
        %s234 = scalar_select %p233, %s16, 1
        %s235 = smul.addr %s234, 4
        %s236 = scalar_lea.vmem %s4, %s235
      $region48: #{my_whole_rgat_forward.5} parent=43 // pred_fallthru
        _
    $region44: #{my_whole_rgat_forward.5} parent=5 // pred_fallthru
      _
  $region6: #{my_whole_rgat_forward.5} parent=0 // loop_footer
    %s14 = sadd.s32 1, %s10
  $region7: #{my_whole_rgat_forward.5} parent=0 // loop_footer_branch
    %9 = sbr.rel target = $region3
  $region8: #{my_whole_rgat_forward.5} parent=0 // loop_exit
    _

// kernel: my_whole_rgat_forward.4
$region0: #{my_whole_rgat_forward.4}
  #allocation0 [shape = 'u32[]', space=smem, size = 0x4, offset = 0x4, fixed_abs, tag = 'smem constant byte address 0x4 - core index']
  #allocation1 [shape = 'u32[72,128]{1,0:T(1,128)}', space=vmem, size = 0x9000, scoped, tag = 'internal scratch']
  #allocation2 [shape = 'f32[2,16,32]{2,1,0:T(8,128)}', space=vmem, size = 0x4000, scoped, tag = 'scratch operand']
  %s0 = inlined_call_operand.vmem [shape: f32[2,16,32], index: 0, kind: input, shape index: {}]
  %s1 = inlined_call_operand.vmem [shape: f32[2,2,16], index: 1, kind: input, shape index: {}]
  %s2 = inlined_call_operand.vmem [shape: f32[32,32], index: 2, kind: input, shape index: {}]
  %s3 = inlined_call_operand.vmem [shape: f32[32,32], index: 3, kind: input, shape index: {}]
  %s4 = inlined_call_operand.vmem [shape: f32[2,32], index: 4, kind: input, shape index: {}]
  %s5 = inlined_call_operand.vmem [shape: f32[1,32], index: 5, kind: input, shape index: {}]
  %s6 = inlined_call_operand.vmem [shape: f32[32,32], index: 6, kind: input, shape index: {}]
  %s7 = inlined_call_operand.vmem [shape: f32[32,32], index: 7, kind: input, shape index: {}]
  %s8 = inlined_call_operand.vmem [shape: f32[1,32], index: 8, kind: input, shape index: {}]
  %s9 = inlined_call_operand.vmem [shape: f32[2,16,32], index: 9, kind: output, shape index: {0}]
  %s10 = inlined_call_operand.vmem [shape: f32[2,2,32], index: 10, kind: output, shape index: {1}]
  %11 = xla_tuple %s9, %s10
  %s12 = sld [smem:[#allocation0]]
  $region81: #{my_whole_rgat_forward.4} parent=0
    _
  %s14 = ssub.s32 1, %s12
  %s15 = scalar_select 0, %s14, %s12
  loop: start=0, step=1, limit=6
  $region2: #{my_whole_rgat_forward.4} parent=0 // loop_pre_header
    _
  $region3: #{my_whole_rgat_forward.4} parent=0 // loop_header
    %s17 = sphi 0, %s21
    %p18 = scmp.ge.s32.totalorder %s17, 6
    %s24 = sphi 0, %s36
    %s25 = sphi 0, %s32
    %s26 = sphi 0, %s24
    %s27 = sphi 0, %s25
    %s28 = sphi 0, %s26
    %s29 = sphi 0, %s27
    %s39 = sphi 0, %s41
    %s42 = sphi 0, %s39
    %s43 = sphi 0, %s42
    %s59 = sphi 0, %s43
    %s65 = sphi 0, %s67
    %s68 = sphi 0, %s65
    %s69 = sphi 0, %s68
    %s85 = sphi 0, %s69
    %s89 = sphi 0, %s89
    %s91 = sphi 0, %s89
    %s92 = sphi 0, %s91
    %s106 = sphi 0, %s92
    %s110 = sphi 0, %s110
    %s112 = sphi 0, %s110
    %s113 = sphi 0, %s112
    %s127 = sphi 0, %s113
    %s131 = sphi 0, %s131
    %s133 = sphi 0, %s131
    %s134 = sphi 0, %s133
    %s148 = sphi 0, %s134
    %s152 = sphi 0, %s152
    %s154 = sphi 0, %s152
    %s155 = sphi 0, %s154
    %s169 = sphi 0, %s155
    %s173 = sphi 0, %s173
    %s175 = sphi 0, %s173
    %s176 = sphi 0, %s175
    %s190 = sphi 0, %s176
    %s194 = sphi 0, %s194
    %s196 = sphi 0, %s194
    %s197 = sphi 0, %s196
    %s211 = sphi 0, %s197
    %s215 = sphi 0, %s215
    %s217 = sphi 0, %s215
    %s218 = sphi 0, %s217
    %s232 = sphi 0, %s218
    %s240 = sphi 0, %s242
    %s243 = sphi 0, %s240
    %s244 = sphi 0, %s243
    %s260 = sphi 0, %s244
    %s266 = sphi 0, %s268
    %s269 = sphi 0, %s266
    %s270 = sphi 0, %s269
    %s286 = sphi 0, %s270
  $region4: #{my_whole_rgat_forward.4} parent=0 // loop_header_branch
    %20 = sbr.rel (%p18) target = $region8
  $region5: #{my_whole_rgat_forward.4} parent=0 // loop_body
    %s22 = ssub.s32 %s17, 1
    %s23 = ssub.s32 %s17, 2
    %s30 = sadd.s32 1, %s25
    %p31 = scmp.ge.s32.totalorder %s30, 2
    %s32 = scalar_select %p31, 0, %s30
    %s33 = sadd.s32 1, %s24
    %s34 = scalar_select %p31, %s33, %s24
    %p35 = scmp.ge.s32.totalorder %s34, 2
    %s36 = scalar_select %p35, 0, %s34
    %s37 = ssub.s32 %s24, %s36
    %p38 = scmp.eq.s32.totalorder %s37, 0
    %s40 = sadd.s32 %s39, 1
    %s41 = scalar_select %p38, %s39, %s40
    %p44 = pneg %p38
    %p45 = scmp.eq.s32.totalorder %s17, 3
    %p46 = por %p44, %p45
    %p47 = scmp.ne.s32.totalorder %s39, %s42
    %p48 = scmp.eq.s32.totalorder %s17, 0
    %p49 = por %p47, %p48
    %p50 = scmp.ne.s32.totalorder %s39, %s42
    %p51 = scmp.eq.s32.totalorder %s22, 3
    %p52 = por %p50, %p51
    %p53 = scmp.ne.s32.totalorder %s42, %s43
    %p54 = scmp.eq.s32.totalorder %s22, 0
    %p55 = por %p53, %p54
    %p56 = scmp.ne.s32.totalorder %s42, %s43
    %p57 = scmp.eq.s32.totalorder %s23, 3
    %p58 = por %p56, %p57
    %p60 = scmp.ne.s32.totalorder %s43, %s59
    %p61 = scmp.eq.s32.totalorder %s23, 0
    %p62 = por %p60, %p61
    %s63 = ssub.s32 %s24, %s36
    %p64 = scmp.eq.s32.totalorder %s63, 0
    %s66 = sadd.s32 %s65, 1
    %s67 = scalar_select %p64, %s65, %s66
    %p70 = pneg %p64
    %p71 = scmp.eq.s32.totalorder %s17, 3
    %p72 = por %p70, %p71
    %p73 = scmp.ne.s32.totalorder %s65, %s68
    %p74 = scmp.eq.s32.totalorder %s17, 0
    %p75 = por %p73, %p74
    %p76 = scmp.ne.s32.totalorder %s65, %s68
    %p77 = scmp.eq.s32.totalorder %s22, 3
    %p78 = por %p76, %p77
    %p79 = scmp.ne.s32.totalorder %s68, %s69
    %p80 = scmp.eq.s32.totalorder %s22, 0
    %p81 = por %p79, %p80
    %p82 = scmp.ne.s32.totalorder %s68, %s69
    %p83 = scmp.eq.s32.totalorder %s23, 3
    %p84 = por %p82, %p83
    %p86 = scmp.ne.s32.totalorder %s69, %s85
    %p87 = scmp.eq.s32.totalorder %s23, 0
    %p88 = por %p86, %p87
    %s90 = sadd.s32 %s89, 1
    %p93 = scmp.eq.s32.totalorder %s17, 3
    %p94 = scmp.ne.s32.totalorder %s89, %s91
    %p95 = scmp.eq.s32.totalorder %s17, 0
    %p96 = por %p94, %p95
    %p97 = scmp.ne.s32.totalorder %s89, %s91
    %p98 = scmp.eq.s32.totalorder %s22, 3
    %p99 = por %p97, %p98
    %p100 = scmp.ne.s32.totalorder %s91, %s92
    %p101 = scmp.eq.s32.totalorder %s22, 0
    %p102 = por %p100, %p101
    %p103 = scmp.ne.s32.totalorder %s91, %s92
    %p104 = scmp.eq.s32.totalorder %s23, 3
    %p105 = por %p103, %p104
    %p107 = scmp.ne.s32.totalorder %s92, %s106
    %p108 = scmp.eq.s32.totalorder %s23, 0
    %p109 = por %p107, %p108
    %s111 = sadd.s32 %s110, 1
    %p114 = scmp.eq.s32.totalorder %s17, 3
    %p115 = scmp.ne.s32.totalorder %s110, %s112
    %p116 = scmp.eq.s32.totalorder %s17, 0
    %p117 = por %p115, %p116
    %p118 = scmp.ne.s32.totalorder %s110, %s112
    %p119 = scmp.eq.s32.totalorder %s22, 3
    %p120 = por %p118, %p119
    %p121 = scmp.ne.s32.totalorder %s112, %s113
    %p122 = scmp.eq.s32.totalorder %s22, 0
    %p123 = por %p121, %p122
    %p124 = scmp.ne.s32.totalorder %s112, %s113
    %p125 = scmp.eq.s32.totalorder %s23, 3
    %p126 = por %p124, %p125
    %p128 = scmp.ne.s32.totalorder %s113, %s127
    %p129 = scmp.eq.s32.totalorder %s23, 0
    %p130 = por %p128, %p129
    %s132 = sadd.s32 %s131, 1
    %p135 = scmp.eq.s32.totalorder %s17, 3
    %p136 = scmp.ne.s32.totalorder %s131, %s133
    %p137 = scmp.eq.s32.totalorder %s17, 0
    %p138 = por %p136, %p137
    %p139 = scmp.ne.s32.totalorder %s131, %s133
    %p140 = scmp.eq.s32.totalorder %s22, 3
    %p141 = por %p139, %p140
    %p142 = scmp.ne.s32.totalorder %s133, %s134
    %p143 = scmp.eq.s32.totalorder %s22, 0
    %p144 = por %p142, %p143
    %p145 = scmp.ne.s32.totalorder %s133, %s134
    %p146 = scmp.eq.s32.totalorder %s23, 3
    %p147 = por %p145, %p146
    %p149 = scmp.ne.s32.totalorder %s134, %s148
    %p150 = scmp.eq.s32.totalorder %s23, 0
    %p151 = por %p149, %p150
    %s153 = sadd.s32 %s152, 1
    %p156 = scmp.eq.s32.totalorder %s17, 3
    %p157 = scmp.ne.s32.totalorder %s152, %s154
    %p158 = scmp.eq.s32.totalorder %s17, 0
    %p159 = por %p157, %p158
    %p160 = scmp.ne.s32.totalorder %s152, %s154
    %p161 = scmp.eq.s32.totalorder %s22, 3
    %p162 = por %p160, %p161
    %p163 = scmp.ne.s32.totalorder %s154, %s155
    %p164 = scmp.eq.s32.totalorder %s22, 0
    %p165 = por %p163, %p164
    %p166 = scmp.ne.s32.totalorder %s154, %s155
    %p167 = scmp.eq.s32.totalorder %s23, 3
    %p168 = por %p166, %p167
    %p170 = scmp.ne.s32.totalorder %s155, %s169
    %p171 = scmp.eq.s32.totalorder %s23, 0
    %p172 = por %p170, %p171
    %s174 = sadd.s32 %s173, 1
    %p177 = scmp.eq.s32.totalorder %s17, 3
    %p178 = scmp.ne.s32.totalorder %s173, %s175
    %p179 = scmp.eq.s32.totalorder %s17, 0
    %p180 = por %p178, %p179
    %p181 = scmp.ne.s32.totalorder %s173, %s175
    %p182 = scmp.eq.s32.totalorder %s22, 3
    %p183 = por %p181, %p182
    %p184 = scmp.ne.s32.totalorder %s175, %s176
    %p185 = scmp.eq.s32.totalorder %s22, 0
    %p186 = por %p184, %p185
    %p187 = scmp.ne.s32.totalorder %s175, %s176
    %p188 = scmp.eq.s32.totalorder %s23, 3
    %p189 = por %p187, %p188
    %p191 = scmp.ne.s32.totalorder %s176, %s190
    %p192 = scmp.eq.s32.totalorder %s23, 0
    %p193 = por %p191, %p192
    %s195 = sadd.s32 %s194, 1
    %p198 = scmp.eq.s32.totalorder %s17, 3
    %p199 = scmp.ne.s32.totalorder %s194, %s196
    %p200 = scmp.eq.s32.totalorder %s17, 0
    %p201 = por %p199, %p200
    %p202 = scmp.ne.s32.totalorder %s194, %s196
    %p203 = scmp.eq.s32.totalorder %s22, 3
    %p204 = por %p202, %p203
    %p205 = scmp.ne.s32.totalorder %s196, %s197
    %p206 = scmp.eq.s32.totalorder %s22, 0
    %p207 = por %p205, %p206
    %p208 = scmp.ne.s32.totalorder %s196, %s197
    %p209 = scmp.eq.s32.totalorder %s23, 3
    %p210 = por %p208, %p209
    %p212 = scmp.ne.s32.totalorder %s197, %s211
    %p213 = scmp.eq.s32.totalorder %s23, 0
    %p214 = por %p212, %p213
    %s216 = sadd.s32 %s215, 1
    %p219 = scmp.eq.s32.totalorder %s17, 3
    %p220 = scmp.ne.s32.totalorder %s215, %s217
    %p221 = scmp.eq.s32.totalorder %s17, 0
    %p222 = por %p220, %p221
    %p223 = scmp.ne.s32.totalorder %s215, %s217
    %p224 = scmp.eq.s32.totalorder %s22, 3
    %p225 = por %p223, %p224
    %p226 = scmp.ne.s32.totalorder %s217, %s218
    %p227 = scmp.eq.s32.totalorder %s22, 0
    %p228 = por %p226, %p227
    %p229 = scmp.ne.s32.totalorder %s217, %s218
    %p230 = scmp.eq.s32.totalorder %s23, 3
    %p231 = por %p229, %p230
    %p233 = scmp.ne.s32.totalorder %s218, %s232
    %p234 = scmp.eq.s32.totalorder %s23, 0
    %p235 = por %p233, %p234
    %s236 = ssub.s32 %s24, %s36
    %s237 = ssub.s32 %s25, %s32
    %s238 = sor.u32 %s236, %s237
    %p239 = scmp.eq.s32.totalorder %s238, 0
    %s241 = sadd.s32 %s240, 1
    %s242 = scalar_select %p239, %s240, %s241
    %p245 = pneg %p239
    %p246 = scmp.eq.s32.totalorder %s17, 3
    %p247 = por %p245, %p246
    %p248 = scmp.ne.s32.totalorder %s240, %s243
    %p249 = scmp.eq.s32.totalorder %s17, 0
    %p250 = por %p248, %p249
    %p251 = scmp.ne.s32.totalorder %s240, %s243
    %p252 = scmp.eq.s32.totalorder %s22, 3
    %p253 = por %p251, %p252
    %p254 = scmp.ne.s32.totalorder %s243, %s244
    %p255 = scmp.eq.s32.totalorder %s22, 0
    %p256 = por %p254, %p255
    %p257 = scmp.ne.s32.totalorder %s243, %s244
    %p258 = scmp.eq.s32.totalorder %s23, 3
    %p259 = por %p257, %p258
    %p261 = scmp.ne.s32.totalorder %s244, %s260
    %p262 = scmp.eq.s32.totalorder %s23, 0
    %p263 = por %p261, %p262
    %s264 = ssub.s32 %s24, %s36
    %p265 = scmp.eq.s32.totalorder %s264, 0
    %s267 = sadd.s32 %s266, 1
    %s268 = scalar_select %p265, %s266, %s267
    %p271 = pneg %p265
    %p272 = scmp.eq.s32.totalorder %s17, 3
    %p273 = por %p271, %p272
    %p274 = scmp.ne.s32.totalorder %s266, %s269
    %p275 = scmp.eq.s32.totalorder %s17, 0
    %p276 = por %p274, %p275
    %p277 = scmp.ne.s32.totalorder %s266, %s269
    %p278 = scmp.eq.s32.totalorder %s22, 3
    %p279 = por %p277, %p278
    %p280 = scmp.ne.s32.totalorder %s269, %s270
    %p281 = scmp.eq.s32.totalorder %s22, 0
    %p282 = por %p280, %p281
    %p283 = scmp.ne.s32.totalorder %s269, %s270
    %p284 = scmp.eq.s32.totalorder %s23, 3
    %p285 = por %p283, %p284
    %p287 = scmp.ne.s32.totalorder %s270, %s286
    %p288 = scmp.eq.s32.totalorder %s23, 0
    %p289 = por %p287, %p288
    %p290 = scmp.le.s32.totalorder 1, %s17
    %p291 = scmp.lt.s32.totalorder %s17, 5
    %p292 = pnand %p290, %p291
    %p293 = pneg %p292
    // Predicated region
    $region9: #{my_whole_rgat_forward.4} parent=5 // pred_check
      _
    $region10: #{my_whole_rgat_forward.4} parent=5 // pred_check_branch
      %295 = sbr.rel (%p292) target = $region12
    $region11: #{my_whole_rgat_forward.4} parent=5 // pred_region
      %s296 = ssub.s32 %s17, 1
      // Predicated region
      $region13: #{my_whole_rgat_forward.4} parent=11 // pred_check
        %p297 = pneg %p102
      $region14: #{my_whole_rgat_forward.4} parent=11 // pred_check_branch
        %299 = sbr.rel (%p297) target = $region16
      $region15: #{my_whole_rgat_forward.4} parent=11 // pred_region
        _
      $region16: #{my_whole_rgat_forward.4} parent=11 // pred_fallthru
        _
      // Predicated region
      $region17: #{my_whole_rgat_forward.4} parent=11 // pred_check
        %p300 = pneg %p123
      $region18: #{my_whole_rgat_forward.4} parent=11 // pred_check_branch
        %302 = sbr.rel (%p300) target = $region20
      $region19: #{my_whole_rgat_forward.4} parent=11 // pred_region
        _
      $region20: #{my_whole_rgat_forward.4} parent=11 // pred_fallthru
        _
      // Predicated region
      $region21: #{my_whole_rgat_forward.4} parent=11 // pred_check
        %p303 = pneg %p144
      $region22: #{my_whole_rgat_forward.4} parent=11 // pred_check_branch
        %305 = sbr.rel (%p303) target = $region24
      $region23: #{my_whole_rgat_forward.4} parent=11 // pred_region
        _
      $region24: #{my_whole_rgat_forward.4} parent=11 // pred_fallthru
        _
      // Predicated region
      $region25: #{my_whole_rgat_forward.4} parent=11 // pred_check
        %p306 = pneg %p165
      $region26: #{my_whole_rgat_forward.4} parent=11 // pred_check_branch
        %308 = sbr.rel (%p306) target = $region28
      $region27: #{my_whole_rgat_forward.4} parent=11 // pred_region
        _
      $region28: #{my_whole_rgat_forward.4} parent=11 // pred_fallthru
        _
      // Predicated region
      $region29: #{my_whole_rgat_forward.4} parent=11 // pred_check
        %p309 = pneg %p186
      $region30: #{my_whole_rgat_forward.4} parent=11 // pred_check_branch
        %311 = sbr.rel (%p309) target = $region32
      $region31: #{my_whole_rgat_forward.4} parent=11 // pred_region
        _
      $region32: #{my_whole_rgat_forward.4} parent=11 // pred_fallthru
        _
      // Predicated region
      $region33: #{my_whole_rgat_forward.4} parent=11 // pred_check
        %p312 = pneg %p207
      $region34: #{my_whole_rgat_forward.4} parent=11 // pred_check_branch
        %314 = sbr.rel (%p312) target = $region36
      $region35: #{my_whole_rgat_forward.4} parent=11 // pred_region
        _
      $region36: #{my_whole_rgat_forward.4} parent=11 // pred_fallthru
        _
      // Predicated region
      $region37: #{my_whole_rgat_forward.4} parent=11 // pred_check
        %p315 = pneg %p228
      $region38: #{my_whole_rgat_forward.4} parent=11 // pred_check_branch
        %317 = sbr.rel (%p315) target = $region40
      $region39: #{my_whole_rgat_forward.4} parent=11 // pred_region
        _
      $region40: #{my_whole_rgat_forward.4} parent=11 // pred_fallthru
        _
    $region12: #{my_whole_rgat_forward.4} parent=5 // pred_fallthru
      _
    %p318 = scmp.lt.s32.totalorder %s17, 4
    // Predicated region
    $region41: #{my_whole_rgat_forward.4} parent=5 // pred_check
      %p319 = pneg %p318
    $region42: #{my_whole_rgat_forward.4} parent=5 // pred_check_branch
      %321 = sbr.rel (%p319) target = $region44
    $region43: #{my_whole_rgat_forward.4} parent=5 // pred_region
      // Predicated region
      $region45: #{my_whole_rgat_forward.4} parent=43 // pred_check
        %p322 = pneg %p49
      $region46: #{my_whole_rgat_forward.4} parent=43 // pred_check_branch
        %324 = sbr.rel (%p322) target = $region48
      $region47: #{my_whole_rgat_forward.4} parent=43 // pred_region
        %p325 = scmp.lt.s32.totalorder %s24, 1
        %s326 = scalar_select %p325, %s24, 1
        %s327 = smul.addr %s326, 2
        %s328 = smul.addr %s327, 8
        %s329 = scalar_lea.vmem %s0, %s328
      $region48: #{my_whole_rgat_forward.4} parent=43 // pred_fallthru
        _
      // Predicated region
      $region49: #{my_whole_rgat_forward.4} parent=43 // pred_check
        %p330 = pneg %p75
      $region50: #{my_whole_rgat_forward.4} parent=43 // pred_check_branch
        %332 = sbr.rel (%p330) target = $region52
      $region51: #{my_whole_rgat_forward.4} parent=43 // pred_region
        %p333 = scmp.lt.s32.totalorder %s24, 1
        %s334 = scalar_select %p333, %s24, 1
        %s335 = smul.addr %s334, 2
        %s336 = scalar_lea.vmem %s1, %s335
      $region52: #{my_whole_rgat_forward.4} parent=43 // pred_fallthru
        _
    $region44: #{my_whole_rgat_forward.4} parent=5 // pred_fallthru
      _
    %p337 = scmp.le.s32.totalorder 1, %s17
    %p338 = scmp.lt.s32.totalorder %s17, 5
    %p339 = pnand %p337, %p338
    %p340 = pneg %p339
    // Predicated region
    $region53: #{my_whole_rgat_forward.4} parent=5 // pred_check
      _
    $region54: #{my_whole_rgat_forward.4} parent=5 // pred_check_branch
      %342 = sbr.rel (%p339) target = $region56
    $region55: #{my_whole_rgat_forward.4} parent=5 // pred_region
      %s343 = ssub.s32 %s17, 1
      %p344 = scmp.lt.s32.totalorder %s26, 1
      %s345 = scalar_select %p344, %s26, 1
      %s346 = smul.addr %s345, 2
      %s347 = smul.addr %s346, 8
      %s348 = scalar_lea.vmem %s0, %s347
      %p349 = pneg %p55
      %p350 = pneg %p52
      %p351 = scmp.lt.s32.totalorder %s26, 1
      %s352 = scalar_select %p351, %s26, 1
      %s353 = smul.addr %s352, 2
      %s354 = scalar_lea.vmem %s1, %s353
      %p355 = pneg %p81
      %p356 = pneg %p78
      %p357 = pneg %p102
      %p358 = pneg %p99
      %p359 = pneg %p123
      %p360 = pneg %p120
      %p361 = pneg %p144
      %p362 = pneg %p141
      %p363 = pneg %p165
      %p364 = pneg %p162
      %p365 = pneg %p186
      %p366 = pneg %p183
      %p367 = pneg %p207
      %p368 = pneg %p204
      %p369 = pneg %p228
      %p370 = pneg %p225
      %p371 = pneg %p256
      %p372 = pneg %p253
      %p373 = scmp.lt.s32.totalorder %s26, 1
      %s374 = scalar_select %p373, %s26, 1
      %p375 = scmp.lt.s32.totalorder %s27, 1
      %s376 = scalar_select %p375, %s27, 1
      %s377 = smul.addr %s374, 2
      %s378 = sadd.s32 %s376, %s377
      %s379 = smul.addr %s378, 8
      %s380 = scalar_lea.vmem %s9, %s379
      %p381 = pneg %p282
      %p382 = pneg %p279
      %p383 = scmp.lt.s32.totalorder %s26, 1
      %s384 = scalar_select %p383, %s26, 1
      %s385 = smul.addr %s384, 2
      %s386 = scalar_lea.vmem %s10, %s385
      %p387 = scmp.lt.s32.totalorder %s26, 1
      %s388 = scalar_select %p387, %s26, 1
      %s389 = smul.addr %s388, 2
      %s390 = smul.addr %s389, 8
      %s391 = scalar_lea.vmem %s0, %s390
      %p392 = scmp.lt.s32.totalorder %s26, 1
      %s393 = scalar_select %p392, %s26, 1
      %s394 = smul.addr %s393, 2
      %s395 = scalar_lea.vmem %s1, %s394
      %p396 = scmp.lt.s32.totalorder %s26, 1
      %s397 = scalar_select %p396, %s26, 1
      %p398 = scmp.lt.s32.totalorder %s27, 1
      %s399 = scalar_select %p398, %s27, 1
      %s400 = smul.addr %s397, 2
      %s401 = sadd.s32 %s399, %s400
      %s402 = smul.addr %s401, 8
      %s403 = scalar_lea.vmem %s9, %s402
      %p404 = scmp.lt.s32.totalorder %s26, 1
      %s405 = scalar_select %p404, %s26, 1
      %s406 = smul.addr %s405, 2
      %s407 = scalar_lea.vmem %s10, %s406
      %p408 = scmp.eq.s32.totalorder %s27, 0
      // Predicated region
      $region57: #{my_whole_rgat_forward.4} parent=55 // pred_check
        %p409 = pneg %p408
      $region58: #{my_whole_rgat_forward.4} parent=55 // pred_check_branch
        %411 = sbr.rel (%p409) target = $region60
      $region59: #{my_whole_rgat_forward.4} parent=55 // pred_region
        %v412 = vld [vmem:[%s391] sm:$0xff]
        %v413 = vld [vmem:[%s391 + $0x8] sm:$0xff]
        %v414 = vld [vmem:[%s2] sm:$0xff]
        %v415 = vld [vmem:[%s2 + $0x8] sm:$0xff]
        %v416 = vld [vmem:[%s2 + $0x10] sm:$0xff]
        %v417 = vld [vmem:[%s2 + $0x18] sm:$0xff]
        %vm418 = vcmask 261120
        %v420 = vsel %vm418, %v412, 0
        %v423 = vsel %vm418, %v413, 0
        %425 = vmatpush.msra.mxu0 0.0
        %426 = vmatpush.msra.mxu0 0.0
        %427 = vmatpush.msra.mxu0 0.0
        %428 = vmatpush.msra.mxu0 0.0
        %429 = vmatpush.msra.mxu0 0.0
        %430 = vmatpush.msra.mxu0 0.0
        %431 = vmatpush.msra.mxu0 0.0
        %432 = vmatpush.msra.mxu0 0.0
        %433 = vmatpush.msra.mxu0 0.0
        %434 = vmatpush.msra.mxu0 0.0
        %435 = vmatpush.msra.mxu0 0.0
        %436 = vmatpush.msra.mxu0 0.0
        %437 = vmatpush.msra.mxu0 %v417
        %438 = vmatpush.msra.mxu0 %v416
        %439 = vmatpush.msra.mxu0 %v415
        %440 = vmatpush.msra.mxu0 %v414
        %441 = vmatmul.f32.gmra.mxu0 %v420
        %v442 = vpop.f32.mrf.mxu0
        %v443 = vadd.f32 0.0, %v442
        %444 = vmatmul.f32.gmra.mxu0 %v423
        %v445 = vpop.f32.mrf.mxu0
        %v446 = vadd.f32 0.0, %v445
        %447 = vdwg.mxu0
        %v448 = vld [vmem:[%s3] sm:$0xff]
        %v449 = vld [vmem:[%s3 + $0x8] sm:$0xff]
        %v450 = vld [vmem:[%s3 + $0x10] sm:$0xff]
        %v451 = vld [vmem:[%s3 + $0x18] sm:$0xff]
        %452 = vmatpush.msra.mxu0 0.0
        %453 = vmatpush.msra.mxu0 0.0
        %454 = vmatpush.msra.mxu0 0.0
        %455 = vmatpush.msra.mxu0 0.0
        %456 = vmatpush.msra.mxu0 0.0
        %457 = vmatpush.msra.mxu0 0.0
        %458 = vmatpush.msra.mxu0 0.0
        %459 = vmatpush.msra.mxu0 0.0
        %460 = vmatpush.msra.mxu0 0.0
        %461 = vmatpush.msra.mxu0 0.0
        %462 = vmatpush.msra.mxu0 0.0
        %463 = vmatpush.msra.mxu0 0.0
        %464 = vmatpush.msra.mxu0 %v451
        %465 = vmatpush.msra.mxu0 %v450
        %466 = vmatpush.msra.mxu0 %v449
        %467 = vmatpush.msra.mxu0 %v448
        %468 = vmatmul.f32.gmra.mxu0 %v420
        %v469 = vpop.f32.mrf.mxu0
        %v470 = vadd.f32 0.0, %v469
        %471 = vmatmul.f32.gmra.mxu0 %v423
        %v472 = vpop.f32.mrf.mxu0
        %v473 = vadd.f32 0.0, %v472
        %474 = vdwg.mxu0
        %475 = vst.msk [vmem:[#allocation2] sm:$0xff] %vm418, %v443
        %476 = vst.msk [vmem:[#allocation2 + $0x8] sm:$0xff] %vm418, %v473
        %s477 = scalar_lea.vmem [#allocation2], 16
        %478 = vst.msk [vmem:[%s477] sm:$0xff] %vm418, %v470
        %479 = vst.msk [vmem:[%s477 + $0x8] sm:$0xff] %vm418, %v446
        %vm480 = vcmask 254976
        %481 = vst.msk [vmem:[%s407] sm:$0x3] %vm480, 0.0
      $region60: #{my_whole_rgat_forward.4} parent=55 // pred_fallthru
        _
      %s482 = smul.u32 %s27, 8
      %s483 = scalar_lea.vmem %s391, %s482
      %v484 = vld [vmem:[%s483] sm:$0xff]
      %v485 = vld [vmem:[%s4] sm:$0x1]
      %v486 = vperm.slane %v485, 0
      %v487 = vmul.f32 %v484, %v486
      %vm488 = vcmask 261120
      %v489 = vsel %vm488, %v487, 0.0
      %490 = vadd.xlane.f32.xlu0 %v489
      %v491 = vpop.xlane.xlu0 %490
      %v492 = vld [vmem:[%s4 + $0x1] sm:$0x1]
      %v493 = vperm.slane %v492, 0
      %v494 = vmul.f32 %v484, %v493
      %v495 = vsel %vm488, %v494, 0.0
      %496 = vadd.xlane.f32.xlu0 %v495
      %v497 = vpop.xlane.xlu0 %496
      %p498 = scmp.ge.s32.totalorder %s482, 8
      %s499 = scalar_select %p498, 1, 0
      %v500 = vlaneseq
      %v501 = vand.u32 %v500, 127
      %vm502 = vcmp.ge.s32.totalorder %v501, 8
      %v503 = vstv %s499
      %vm504 = vcmp.eq.s32.totalorder %v503, 1
      %vm505 = vmxor %vm502, %vm504
      %vm506 = vmxor %vm505, 1
      %v507 = vld [vmem:[%s395 + $0x1] sm:$0x1]
      %v508 = vld [vmem:[%s395] sm:$0x1]
      %v509 = vsel %vm504, %v507, %v508
      %v510 = vsel %vm506, 1, 0
      %vm511 = vcmp.eq.s32.totalorder %v510, 1
      %v512 = vsel %vm511, %v491, %v497
      %v513 = vperm.slane %v509, 0
      %v514 = vadd.f32 %v512, %v513
      %vm515 = vcmp.gt.f32.partialorder %v514, 0.0
      %v516 = vmul.f32 %v514, 0.2
      %v517 = vsel %vm515, %v514, %v516
      %v518 = vlaneseq
      %v519 = vshrl.u32 %v518, 7
      %v520 = vstv %s482
      %v521 = vadd.s32 %v520, %v519
      %vm522 = vcmp.eq.s32.totalorder %v521, %v501
      %v523 = vsel %vm522, -1e+30, %v517
      %vm524 = vcmask 130048
      %v525 = vsel %vm524, %v523, -inf
      %526 = vmax.xlane.f32.xlu0 %v525
      %v527 = vpop.xlane.xlu0 %526
      %v528 = vsub.f32 %v523, %v527
      %v529 = vmul.f32 %v528, 1.442695
      %v530 = vpow.pop %v529
      %v531 = vsel %vm524, %v530, 0.0
      %532 = vadd.xlane.f32.xlu0 %v531
      %v533 = vpop.xlane.xlu0 %532
      %v534 = vrcp.pop %v533
      %v535 = vmul.f32 %v530, %v534
      %s536 = smul.u32 %s499, 16
      %s537 = scalar_lea.vmem [#allocation2], %s536
      %v538 = vld [vmem:[%s537] sm:$0xff]
      %v539 = vld [vmem:[%s537 + $0x8] sm:$0xff]
      %v540 = vld [vmem:[%s5] sm:$0x1]
      %v542 = vperm.slane %v540, 0
      %v545 = vsel %vm524, %v535, 0
      %547 = vmatpush.msra.mxu0 0.0
      %548 = vmatpush.msra.mxu0 0.0
      %549 = vmatpush.msra.mxu0 0.0
      %550 = vmatpush.msra.mxu0 0.0
      %551 = vmatpush.msra.mxu0 0.0
      %552 = vmatpush.msra.mxu0 0.0
      %553 = vmatpush.msra.mxu0 0.0
      %554 = vmatpush.msra.mxu0 0.0
      %555 = vmatpush.msra.mxu0 0.0
      %556 = vmatpush.msra.mxu0 0.0
      %557 = vmatpush.msra.mxu0 0.0
      %558 = vmatpush.msra.mxu0 0.0
      %559 = vmatpush.msra.mxu0 0.0
      %560 = vmatpush.msra.mxu0 0.0
      %561 = vmatpush.msra.mxu0 %v539
      %562 = vmatpush.msra.mxu0 %v538
      %563 = vmatmul.f32.gmra.mxu0 %v545
      %v564 = vpop.f32.mrf.mxu0
      %v565 = vadd.f32 %v542, %v564
      %566 = vdwg.mxu0
      %v567 = vmax.f32 %v565, 0.0
      %v568 = vld [vmem:[%s6] sm:$0xff]
      %v569 = vld [vmem:[%s6 + $0x8] sm:$0xff]
      %v570 = vld [vmem:[%s6 + $0x10] sm:$0xff]
      %v571 = vld [vmem:[%s6 + $0x18] sm:$0xff]
      %v572 = vld [vmem:[%s7] sm:$0xff]
      %v573 = vld [vmem:[%s7 + $0x8] sm:$0xff]
      %v574 = vld [vmem:[%s7 + $0x10] sm:$0xff]
      %v575 = vld [vmem:[%s7 + $0x18] sm:$0xff]
      %v577 = vsel %vm488, %v567, 0
      %579 = vmatpush.msra.mxu0 0.0
      %580 = vmatpush.msra.mxu0 0.0
      %581 = vmatpush.msra.mxu0 0.0
      %582 = vmatpush.msra.mxu0 0.0
      %583 = vmatpush.msra.mxu0 0.0
      %584 = vmatpush.msra.mxu0 0.0
      %585 = vmatpush.msra.mxu0 0.0
      %586 = vmatpush.msra.mxu0 0.0
      %587 = vmatpush.msra.mxu0 0.0
      %588 = vmatpush.msra.mxu0 0.0
      %589 = vmatpush.msra.mxu0 0.0
      %590 = vmatpush.msra.mxu0 0.0
      %591 = vmatpush.msra.mxu0 %v575
      %592 = vmatpush.msra.mxu0 %v574
      %593 = vmatpush.msra.mxu0 %v573
      %594 = vmatpush.msra.mxu0 %v572
      %595 = vmatmul.f32.gmra.mxu0 %v577
      %v596 = vpop.f32.mrf.mxu0
      %v597 = vadd.f32 0.0, %v596
      %598 = vdwg.mxu0
      %v600 = vsel %vm488, %v484, 0
      %602 = vmatpush.msra.mxu0 0.0
      %603 = vmatpush.msra.mxu0 0.0
      %604 = vmatpush.msra.mxu0 0.0
      %605 = vmatpush.msra.mxu0 0.0
      %606 = vmatpush.msra.mxu0 0.0
      %607 = vmatpush.msra.mxu0 0.0
      %608 = vmatpush.msra.mxu0 0.0
      %609 = vmatpush.msra.mxu0 0.0
      %610 = vmatpush.msra.mxu0 0.0
      %611 = vmatpush.msra.mxu0 0.0
      %612 = vmatpush.msra.mxu0 0.0
      %613 = vmatpush.msra.mxu0 0.0
      %614 = vmatpush.msra.mxu0 %v571
      %615 = vmatpush.msra.mxu0 %v570
      %616 = vmatpush.msra.mxu0 %v569
      %617 = vmatpush.msra.mxu0 %v568
      %618 = vmatmul.f32.gmra.mxu0 %v600
      %v619 = vpop.f32.mrf.mxu0
      %v620 = vadd.f32 %v597, %v619
      %621 = vdwg.mxu0
      %v622 = vld [vmem:[%s8] sm:$0x1]
      %v624 = vperm.slane %v622, 0
      %v626 = vadd.f32 %v620, %v624
      %627 = vst.msk [vmem:[%s403] sm:$0xff] %vm488, %v626
      %v628 = vsel %vm488, %v626, 0.0
      %v629 = vrot.slane %v628, 4
      %v630 = vadd.f32 %v628, %v629
      %v631 = vrot.slane %v630, 2
      %v632 = vadd.f32 %v630, %v631
      %v633 = vrot.slane %v632, 1
      %v634 = vadd.f32 %v632, %v633
      %v635 = vmul.f32 %v626, %v626
      %v636 = vsel %vm488, %v635, 0.0
      %v637 = vrot.slane %v636, 4
      %v638 = vadd.f32 %v636, %v637
      %v639 = vrot.slane %v638, 2
      %v640 = vadd.f32 %v638, %v639
      %v641 = vrot.slane %v640, 1
      %v642 = vadd.f32 %v640, %v641
      %v643 = vld [vmem:[%s407] sm:$0x3]
      %vm644 = vcmask 1040384
      %v645 = vsel %vm644, %v634, %v642
      %v646 = vadd.f32 %v643, %v645
      %vm647 = vcmask 254976
      %648 = vst.msk [vmem:[%s407] sm:$0x3] %vm647, %v646
      %p649 = scmp.lt.s32.totalorder %s26, 1
      %s650 = scalar_select %p649, %s26, 1
      %p651 = scmp.lt.s32.totalorder %s27, 1
      %s652 = scalar_select %p651, %s27, 1
      %s653 = smul.addr %s650, 2
      %s654 = sadd.s32 %s652, %s653
      %s655 = smul.addr %s654, 8
      %s656 = scalar_lea.vmem %s9, %s655
      %p657 = scmp.lt.s32.totalorder %s26, 1
      %s658 = scalar_select %p657, %s26, 1
      %s659 = smul.addr %s658, 2
      %s660 = scalar_lea.vmem %s10, %s659
      // Predicated region
      $region61: #{my_whole_rgat_forward.4} parent=55 // pred_check
        %p661 = pneg %p253
      $region62: #{my_whole_rgat_forward.4} parent=55 // pred_check_branch
        %663 = sbr.rel (%p661) target = $region64
      $region63: #{my_whole_rgat_forward.4} parent=55 // pred_region
        _
      $region64: #{my_whole_rgat_forward.4} parent=55 // pred_fallthru
        _
      // Predicated region
      $region65: #{my_whole_rgat_forward.4} parent=55 // pred_check
        %p664 = pneg %p279
      $region66: #{my_whole_rgat_forward.4} parent=55 // pred_check_branch
        %666 = sbr.rel (%p664) target = $region68
      $region67: #{my_whole_rgat_forward.4} parent=55 // pred_region
        _
      $region68: #{my_whole_rgat_forward.4} parent=55 // pred_fallthru
        _
    $region56: #{my_whole_rgat_forward.4} parent=5 // pred_fallthru
      _
    %p667 = scmp.le.s32.totalorder 2, %s17
    // Predicated region
    $region69: #{my_whole_rgat_forward.4} parent=5 // pred_check
      %p668 = pneg %p667
    $region70: #{my_whole_rgat_forward.4} parent=5 // pred_check_branch
      %670 = sbr.rel (%p668) target = $region72
    $region71: #{my_whole_rgat_forward.4} parent=5 // pred_region
      %s671 = ssub.s32 %s17, 2
      // Predicated region
      $region73: #{my_whole_rgat_forward.4} parent=71 // pred_check
        %p672 = pneg %p259
      $region74: #{my_whole_rgat_forward.4} parent=71 // pred_check_branch
        %674 = sbr.rel (%p672) target = $region76
      $region75: #{my_whole_rgat_forward.4} parent=71 // pred_region
        %p675 = scmp.lt.s32.totalorder %s28, 1
        %s676 = scalar_select %p675, %s28, 1
        %p677 = scmp.lt.s32.totalorder %s29, 1
        %s678 = scalar_select %p677, %s29, 1
        %s679 = smul.addr %s676, 2
        %s680 = sadd.s32 %s678, %s679
        %s681 = smul.addr %s680, 8
        %s682 = scalar_lea.vmem %s9, %s681
      $region76: #{my_whole_rgat_forward.4} parent=71 // pred_fallthru
        _
      // Predicated region
      $region77: #{my_whole_rgat_forward.4} parent=71 // pred_check
        %p683 = pneg %p285
      $region78: #{my_whole_rgat_forward.4} parent=71 // pred_check_branch
        %685 = sbr.rel (%p683) target = $region80
      $region79: #{my_whole_rgat_forward.4} parent=71 // pred_region
        %p686 = scmp.lt.s32.totalorder %s28, 1
        %s687 = scalar_select %p686, %s28, 1
        %s688 = smul.addr %s687, 2
        %s689 = scalar_lea.vmem %s10, %s688
      $region80: #{my_whole_rgat_forward.4} parent=71 // pred_fallthru
        _
    $region72: #{my_whole_rgat_forward.4} parent=5 // pred_fallthru
      _
  $region6: #{my_whole_rgat_forward.4} parent=0 // loop_footer
    %s21 = sadd.s32 1, %s17
  $region7: #{my_whole_rgat_forward.4} parent=0 // loop_footer_branch
    %16 = sbr.rel target = $region3
  $region8: #{my_whole_rgat_forward.4} parent=0 // loop_exit
    _

</llo_original>
